<compile_context>
chip_gen: v7x
topology: tpu7x:2x2x1
jax: 0.10.0
libtpu: 0.0.40
codegen_flags: <defaults>
</compile_context>

<pallas_src>
import jax
import jax.numpy as jnp
from jax.experimental import pallas as pl
from jax.experimental.pallas import tpu as pltpu

# ----------------------------- hyper-parameters -----------------------------
NDIMS = 4                      # ndims of latent code
SIREN_HIDDEN = 32              # siren_hidden_features
SIREN_LAYERS = 3               # siren_hidden_layers  -> number of FiLM layers
MAP_HIDDEN = 32                # mapping_network_features
MAP_LAYERS = 2                 # mapping_network_layers (hidden LeakyReLU layers)
OUT_FEATURES = 3               # out_features
IN_FEATURES = NDIMS            # SO3: siren input dim  = ndims
MN_IN = NDIMS * NDIMS          # SO3: mapping-net input dim = ndims*ndims
MAP_OUT = SIREN_LAYERS * SIREN_HIDDEN * 2   # len(net) * hidden * 2
HALF = MAP_OUT // 2            # = SIREN_LAYERS * SIREN_HIDDEN

B = 2                          # batch (number of latent codes / direction sets)
N = 128                        # number of directions per batch element (lane axis)


# --------------------------------- kernel -----------------------------------
def reni_kernel(dT_ref, w0T_ref, fr_ref, ph_ref, *refs):
    """One grid step handles one full batch element (all N directions).

    refs = (film_b0T,
            film_wT_1, film_bT_1, ..., film_wT_{S-1}, film_bT_{S-1},
            final_wT, final_bT, o_ref)

    Layout is transposed / lane-dense: every activation is (features, N).
    """
    b0_ref = refs[0]
    hidden_refs = refs[1: 1 + 2 * (SIREN_LAYERS - 1)]
    wfT_ref = refs[1 + 2 * (SIREN_LAYERS - 1)]
    bfT_ref = refs[2 + 2 * (SIREN_LAYERS - 1)]
    o_ref = refs[-1]

    dT = dT_ref[0]                    # (3, N)  D^T for this batch element
    w0T = w0T_ref[0]                  # (H, 3)  per-batch folded first-layer weight
    freqs = fr_ref[0]                 # (HALF, 1)  already *15 + 30
    phases = ph_ref[0]                # (HALF, 1)

    # ---- FiLM layer 0 (Z already folded into the weight): 3 broadcast FMAs ----
    lin = (w0T[:, 0:1] * dT[0:1, :]
           + w0T[:, 1:2] * dT[1:2, :]
           + w0T[:, 2:3] * dT[2:3, :]) + b0_ref[...]               # (H, N)
    x = jnp.sin(freqs[0:SIREN_HIDDEN, :] * lin + phases[0:SIREN_HIDDEN, :])

    # ---- Remaining FiLM layers: x = sin(f * (W^T x + b) + p), all (H, N) ----
    for i in range(1, SIREN_LAYERS):
        wT = hidden_refs[2 * (i - 1)][...]                         # (H, H)
        bT = hidden_refs[2 * (i - 1) + 1][...]                     # (H, 1)
        lin = jnp.dot(wT, x, preferred_element_type=jnp.float32) + bT
        f = freqs[i * SIREN_HIDDEN:(i + 1) * SIREN_HIDDEN, :]      # (H, 1)
        p = phases[i * SIREN_HIDDEN:(i + 1) * SIREN_HIDDEN, :]     # (H, 1)
        x = jnp.sin(f * lin + p)

    out = jnp.dot(wfT_ref[...], x, preferred_element_type=jnp.float32) + bfT_ref[...]
    o_ref[0] = jnp.exp(out)           # (OUT_FEATURES, N), unmasked 128-lane stores


# --------------------------------- wrapper -----------------------------------
def reni_forward(Z, D, params):
    """Z: (B, NDIMS, 3), D: (B, N, 3) -> (B, N, OUT_FEATURES)."""
    Bsz, Nd, _ = D.shape

    # ---- JAX glue: SO3-invariant mapping input + mapping network (M=1 MLP) ----
    # Hoisted out of the kernel: three serialized (1,16)/(1,32) matmuls are ~0%
    # MXU utilization and would sit on the kernel's serial prologue.
    G = jnp.einsum('bij,bkj->bik', Z, Z)                          # (B, NDIMS, NDIMS)
    h = G.reshape(Bsz, MN_IN)                                     # (B, MN_IN)
    for i in range(MAP_LAYERS):
        h = h @ params[f'mw{i}'] + params[f'mb{i}']
        h = jnp.where(h > 0, h, 0.2 * h)                          # LeakyReLU(0.2)
    fo = h @ params[f'mw{MAP_LAYERS}'] + params[f'mb{MAP_LAYERS}']  # (B, MAP_OUT)
    freqs = (fo[:, :HALF] * 15.0 + 30.0)[..., None]               # (B, HALF, 1)
    phases = fo[:, HALF:][..., None]                              # (B, HALF, 1)

    # Lane-dense transposed direction layout: (B, 3, N).
    DT = jnp.transpose(D, (0, 2, 1))

    # First-layer fold: lin0^T = (W0^T Z) @ D^T  ->  per-batch (H, 3) weight.
    W0effT = jnp.einsum('kh,bkj->bhj', params['fw0'], Z)          # (B, H, 3)

    # Pre-transposed shared FiLM / final-layer parameters (features-major).
    param_arrays = []
    param_specs = []

    def add_param(a):
        param_arrays.append(a)
        param_specs.append(pl.BlockSpec(a.shape, lambda *_, n=a.ndim: (0,) * n))

    add_param(params['fb0'].reshape(-1, 1))                       # (H, 1)
    for i in range(1, SIREN_LAYERS):
        add_param(jnp.transpose(params[f'fw{i}']))                # (H, H)
        add_param(params[f'fb{i}'].reshape(-1, 1))                # (H, 1)
    add_param(jnp.transpose(params['wf']))                        # (OUT, H)
    add_param(params['bf'].reshape(-1, 1))                        # (OUT, 1)

    grid = (Bsz,)
    in_specs = [
        pl.BlockSpec((1, 3, Nd), lambda b: (b, 0, 0)),            # D^T tile (full N)
        pl.BlockSpec((1, SIREN_HIDDEN, 3), lambda b: (b, 0, 0)),  # folded W0 for batch b
        pl.BlockSpec((1, HALF, 1), lambda b: (b, 0, 0)),          # freqs for batch b
        pl.BlockSpec((1, HALF, 1), lambda b: (b, 0, 0)),          # phases for batch b
    ] + param_specs
    out_specs = pl.BlockSpec((1, OUT_FEATURES, Nd), lambda b: (b, 0, 0))

    outT = pl.pallas_call(
        reni_kernel,
        out_shape=jax.ShapeDtypeStruct((Bsz, OUT_FEATURES, Nd), jnp.float32),
        grid=grid,
        in_specs=in_specs,
        out_specs=out_specs,
        compiler_params=pltpu.CompilerParams(
            dimension_semantics=("parallel",)),   # one batch element per TC on v7x
    )(DT, W0effT, freqs, phases, *param_arrays)

    # Back to the module's (B, N, OUT_FEATURES) layout.
    return jnp.transpose(outT, (0, 2, 1))


# ----------------------- deterministic parameter init ------------------------
def init_params(key):
    params = {}
    ks = jax.random.split(key, 64)
    ki = iter(range(64))

    def uniform(k, shape, bound):
        return jax.random.uniform(k, shape, jnp.float32, -bound, bound)

    # Mapping network: kaiming-normal-ish (fan_in, leaky 0.2) hidden layers; last *0.25.
    fan_in = MN_IN
    for i in range(MAP_LAYERS):
        gain = (2.0 / (1.0 + 0.2 ** 2)) ** 0.5
        std = gain / (fan_in ** 0.5)
        params[f'mw{i}'] = std * jax.random.normal(ks[next(ki)], (fan_in, MAP_HIDDEN), jnp.float32)
        params[f'mb{i}'] = uniform(ks[next(ki)], (1, MAP_HIDDEN), 1.0 / (fan_in ** 0.5))
        fan_in = MAP_HIDDEN
    gain = (2.0 / (1.0 + 0.2 ** 2)) ** 0.5
    std = 0.25 * gain / (fan_in ** 0.5)
    params[f'mw{MAP_LAYERS}'] = std * jax.random.normal(ks[next(ki)], (fan_in, MAP_OUT), jnp.float32)
    params[f'mb{MAP_LAYERS}'] = uniform(ks[next(ki)], (1, MAP_OUT), 1.0 / (fan_in ** 0.5))

    # FiLM layers: first layer uniform(-1/in, 1/in); rest frequency_init(25).
    fan_in = IN_FEATURES
    for i in range(SIREN_LAYERS):
        if i == 0:
            bound = 1.0 / fan_in
        else:
            bound = (6.0 / fan_in) ** 0.5 / 25.0
        params[f'fw{i}'] = uniform(ks[next(ki)], (fan_in, SIREN_HIDDEN), bound)
        params[f'fb{i}'] = uniform(ks[next(ki)], (1, SIREN_HIDDEN), 1.0 / (fan_in ** 0.5))
        fan_in = SIREN_HIDDEN

    # Final layer: frequency_init(25).
    bound = (6.0 / SIREN_HIDDEN) ** 0.5 / 25.0
    params['wf'] = uniform(ks[next(ki)], (SIREN_HIDDEN, OUT_FEATURES), bound)
    params['bf'] = uniform(ks[next(ki)], (1, OUT_FEATURES), 1.0 / (SIREN_HIDDEN ** 0.5))
    return params


# ------------------------------ pure-JAX reference ---------------------------
def reni_reference(Z, D, params):
    G = jnp.einsum('bij,bkj->bik', Z, Z)
    siren = jnp.einsum('bnj,bkj->bnk', D, Z)                      # (B, N, NDIMS)
    m = G.reshape(Z.shape[0], 1, MN_IN)
    h = m
    for i in range(MAP_LAYERS):
        h = h @ params[f'mw{i}'] + params[f'mb{i}']
        h = jnp.where(h > 0, h, 0.2 * h)
    fo = h @ params[f'mw{MAP_LAYERS}'] + params[f'mb{MAP_LAYERS}']
    freqs = fo[..., :HALF] * 15.0 + 30.0
    phases = fo[..., HALF:]
    x = siren
    for i in range(SIREN_LAYERS):
        lin = x @ params[f'fw{i}'] + params[f'fb{i}']
        f = freqs[..., i * SIREN_HIDDEN:(i + 1) * SIREN_HIDDEN]
        p = phases[..., i * SIREN_HIDDEN:(i + 1) * SIREN_HIDDEN]
        x = jnp.sin(f * lin + p)
    out = x @ params['wf'] + params['bf']
    return jnp.exp(out)


# ----------------------------------- main ------------------------------------
if __name__ == "__main__":
    key = jax.random.PRNGKey(0)
    k_z, k_d, k_p = jax.random.split(key, 3)

    # Latent codes Z (as passed directly to forward(x: Tensor, directions)).
    Z = jax.random.normal(k_z, (B, NDIMS, 3), jnp.float32)
    # Unit direction vectors D.
    D = jax.random.normal(k_d, (B, N, 3), jnp.float32)
    D = D / jnp.linalg.norm(D, axis=-1, keepdims=True)

    params = init_params(k_p)

    out = reni_forward(Z, D, params)
    out = jax.block_until_ready(out)

    ref = reni_reference(Z, D, params)
    assert out.shape == (B, N, OUT_FEATURES)
    assert jnp.allclose(out, ref, rtol=3e-4, atol=3e-4), float(jnp.max(jnp.abs(out - ref)))

    print("KERNEL_OK")
</pallas_src>

<mosaic_0001>
module attributes {stable_mosaic.version = 11 : i64} {
  func.func @reni_kernel(%arg0: i32, %arg1: memref<1x3x128xf32, #tpu.memory_space<vmem>>, %arg2: memref<1x32x3xf32, #tpu.memory_space<vmem>>, %arg3: memref<1x96x1xf32, #tpu.memory_space<vmem>>, %arg4: memref<1x96x1xf32, #tpu.memory_space<vmem>>, %arg5: memref<32x1xf32, #tpu.memory_space<vmem>>, %arg6: memref<32x32xf32, #tpu.memory_space<vmem>>, %arg7: memref<32x1xf32, #tpu.memory_space<vmem>>, %arg8: memref<32x32xf32, #tpu.memory_space<vmem>>, %arg9: memref<32x1xf32, #tpu.memory_space<vmem>>, %arg10: memref<3x32xf32, #tpu.memory_space<vmem>>, %arg11: memref<3x1xf32, #tpu.memory_space<vmem>>, %arg12: memref<1x3x128xf32, #tpu.memory_space<vmem>>) attributes {dimension_semantics = [#tpu.dimension_semantics<parallel>], iteration_bounds = array<i64: 2>, scalar_prefetch = 0 : i64, scratch_operands = 0 : i64, tpu.core_type = #tpu.core_type<tc>, window_params = [{transform_indices = @transform_0, window_bounds = array<i64: 1, 3, 128>}, {transform_indices = @transform_1, window_bounds = array<i64: 1, 32, 3>}, {transform_indices = @transform_2, window_bounds = array<i64: 1, 96, 1>}, {transform_indices = @transform_3, window_bounds = array<i64: 1, 96, 1>}, {pipeline_mode = #tpu.pipeline_mode<synchronous>, transform_indices = @transform_4, window_bounds = array<i64: 32, 1>}, {pipeline_mode = #tpu.pipeline_mode<synchronous>, transform_indices = @transform_5, window_bounds = array<i64: 32, 32>}, {pipeline_mode = #tpu.pipeline_mode<synchronous>, transform_indices = @transform_6, window_bounds = array<i64: 32, 1>}, {pipeline_mode = #tpu.pipeline_mode<synchronous>, transform_indices = @transform_7, window_bounds = array<i64: 32, 32>}, {pipeline_mode = #tpu.pipeline_mode<synchronous>, transform_indices = @transform_8, window_bounds = array<i64: 32, 1>}, {pipeline_mode = #tpu.pipeline_mode<synchronous>, transform_indices = @transform_9, window_bounds = array<i64: 3, 32>}, {pipeline_mode = #tpu.pipeline_mode<synchronous>, transform_indices = @transform_10, window_bounds = array<i64: 3, 1>}, {transform_indices = @transform_11, window_bounds = array<i64: 1, 3, 128>}]} {
    %c0 = arith.constant 0 : index
    %c0_0 = arith.constant 0 : index
    %c0_1 = arith.constant 0 : index
    %0 = vector.load %arg1[%c0, %c0_0, %c0_1] : memref<1x3x128xf32, #tpu.memory_space<vmem>>, vector<1x3x128xf32>
    %1 = vector.shape_cast %0 : vector<1x3x128xf32> to vector<3x128xf32>
    %c0_2 = arith.constant 0 : index
    %c0_3 = arith.constant 0 : index
    %c0_4 = arith.constant 0 : index
    %2 = vector.load %arg2[%c0_2, %c0_3, %c0_4] : memref<1x32x3xf32, #tpu.memory_space<vmem>>, vector<1x32x3xf32>
    %3 = vector.shape_cast %2 : vector<1x32x3xf32> to vector<32x3xf32>
    %c0_5 = arith.constant 0 : index
    %c0_6 = arith.constant 0 : index
    %c0_7 = arith.constant 0 : index
    %4 = vector.load %arg3[%c0_5, %c0_6, %c0_7] : memref<1x96x1xf32, #tpu.memory_space<vmem>>, vector<1x96x1xf32>
    %5 = vector.shape_cast %4 : vector<1x96x1xf32> to vector<96x1xf32>
    %c0_8 = arith.constant 0 : index
    %c0_9 = arith.constant 0 : index
    %c0_10 = arith.constant 0 : index
    %6 = vector.load %arg4[%c0_8, %c0_9, %c0_10] : memref<1x96x1xf32, #tpu.memory_space<vmem>>, vector<1x96x1xf32>
    %7 = vector.shape_cast %6 : vector<1x96x1xf32> to vector<96x1xf32>
    %8 = vector.extract_strided_slice %3 {offsets = [0, 0], sizes = [32, 1], strides = [1, 1]} : vector<32x3xf32> to vector<32x1xf32>
    %9 = vector.extract_strided_slice %1 {offsets = [0, 0], sizes = [1, 128], strides = [1, 1]} : vector<3x128xf32> to vector<1x128xf32>
    %10 = vector.broadcast %8 : vector<32x1xf32> to vector<32x128xf32>
    %11 = vector.broadcast %9 : vector<1x128xf32> to vector<32x128xf32>
    %12 = arith.mulf %10, %11 : vector<32x128xf32>
    %13 = vector.extract_strided_slice %3 {offsets = [0, 1], sizes = [32, 1], strides = [1, 1]} : vector<32x3xf32> to vector<32x1xf32>
    %14 = vector.extract_strided_slice %1 {offsets = [1, 0], sizes = [1, 128], strides = [1, 1]} : vector<3x128xf32> to vector<1x128xf32>
    %15 = vector.broadcast %13 : vector<32x1xf32> to vector<32x128xf32>
    %16 = vector.broadcast %14 : vector<1x128xf32> to vector<32x128xf32>
    %17 = arith.mulf %15, %16 : vector<32x128xf32>
    %18 = arith.addf %12, %17 : vector<32x128xf32>
    %19 = vector.extract_strided_slice %3 {offsets = [0, 2], sizes = [32, 1], strides = [1, 1]} : vector<32x3xf32> to vector<32x1xf32>
    %20 = vector.extract_strided_slice %1 {offsets = [2, 0], sizes = [1, 128], strides = [1, 1]} : vector<3x128xf32> to vector<1x128xf32>
    %21 = vector.broadcast %19 : vector<32x1xf32> to vector<32x128xf32>
    %22 = vector.broadcast %20 : vector<1x128xf32> to vector<32x128xf32>
    %23 = arith.mulf %21, %22 : vector<32x128xf32>
    %24 = arith.addf %18, %23 : vector<32x128xf32>
    %c0_11 = arith.constant 0 : index
    %c0_12 = arith.constant 0 : index
    %25 = vector.load %arg5[%c0_11, %c0_12] : memref<32x1xf32, #tpu.memory_space<vmem>>, vector<32x1xf32>
    %26 = vector.broadcast %25 : vector<32x1xf32> to vector<32x128xf32>
    %27 = arith.addf %24, %26 : vector<32x128xf32>
    %28 = vector.extract_strided_slice %5 {offsets = [0, 0], sizes = [32, 1], strides = [1, 1]} : vector<96x1xf32> to vector<32x1xf32>
    %29 = vector.broadcast %28 : vector<32x1xf32> to vector<32x128xf32>
    %30 = arith.mulf %29, %27 : vector<32x128xf32>
    %31 = vector.extract_strided_slice %7 {offsets = [0, 0], sizes = [32, 1], strides = [1, 1]} : vector<96x1xf32> to vector<32x1xf32>
    %32 = vector.broadcast %31 : vector<32x1xf32> to vector<32x128xf32>
    %33 = arith.addf %30, %32 : vector<32x128xf32>
    %34 = math.sin %33 : vector<32x128xf32>
    %c0_13 = arith.constant 0 : index
    %c0_14 = arith.constant 0 : index
    %35 = vector.load %arg6[%c0_13, %c0_14] : memref<32x32xf32, #tpu.memory_space<vmem>>, vector<32x32xf32>
    %c0_15 = arith.constant 0 : index
    %c0_16 = arith.constant 0 : index
    %36 = vector.load %arg7[%c0_15, %c0_16] : memref<32x1xf32, #tpu.memory_space<vmem>>, vector<32x1xf32>
    %cst = arith.constant dense<0.000000e+00> : vector<32x128xf32>
    %37 = tpu.matmul %35, %34, %cst {dimension_numbers = #tpu.dot_dimension_numbers<[1], [0], [0], [1], [0, 0, 1, 1], [], []>} : vector<32x32xf32>, vector<32x128xf32>, vector<32x128xf32> -> vector<32x128xf32>
    %38 = vector.broadcast %36 : vector<32x1xf32> to vector<32x128xf32>
    %39 = arith.addf %37, %38 : vector<32x128xf32>
    %40 = vector.extract_strided_slice %5 {offsets = [32, 0], sizes = [32, 1], strides = [1, 1]} : vector<96x1xf32> to vector<32x1xf32>
    %41 = vector.extract_strided_slice %7 {offsets = [32, 0], sizes = [32, 1], strides = [1, 1]} : vector<96x1xf32> to vector<32x1xf32>
    %42 = vector.broadcast %40 : vector<32x1xf32> to vector<32x128xf32>
    %43 = arith.mulf %42, %39 : vector<32x128xf32>
    %44 = vector.broadcast %41 : vector<32x1xf32> to vector<32x128xf32>
    %45 = arith.addf %43, %44 : vector<32x128xf32>
    %46 = math.sin %45 : vector<32x128xf32>
    %c0_17 = arith.constant 0 : index
    %c0_18 = arith.constant 0 : index
    %47 = vector.load %arg8[%c0_17, %c0_18] : memref<32x32xf32, #tpu.memory_space<vmem>>, vector<32x32xf32>
    %c0_19 = arith.constant 0 : index
    %c0_20 = arith.constant 0 : index
    %48 = vector.load %arg9[%c0_19, %c0_20] : memref<32x1xf32, #tpu.memory_space<vmem>>, vector<32x1xf32>
    %cst_21 = arith.constant dense<0.000000e+00> : vector<32x128xf32>
    %49 = tpu.matmul %47, %46, %cst_21 {dimension_numbers = #tpu.dot_dimension_numbers<[1], [0], [0], [1], [0, 0, 1, 1], [], []>} : vector<32x32xf32>, vector<32x128xf32>, vector<32x128xf32> -> vector<32x128xf32>
    %50 = vector.broadcast %48 : vector<32x1xf32> to vector<32x128xf32>
    %51 = arith.addf %49, %50 : vector<32x128xf32>
    %52 = vector.extract_strided_slice %5 {offsets = [64, 0], sizes = [32, 1], strides = [1, 1]} : vector<96x1xf32> to vector<32x1xf32>
    %53 = vector.extract_strided_slice %7 {offsets = [64, 0], sizes = [32, 1], strides = [1, 1]} : vector<96x1xf32> to vector<32x1xf32>
    %54 = vector.broadcast %52 : vector<32x1xf32> to vector<32x128xf32>
    %55 = arith.mulf %54, %51 : vector<32x128xf32>
    %56 = vector.broadcast %53 : vector<32x1xf32> to vector<32x128xf32>
    %57 = arith.addf %55, %56 : vector<32x128xf32>
    %58 = math.sin %57 : vector<32x128xf32>
    %c0_22 = arith.constant 0 : index
    %c0_23 = arith.constant 0 : index
    %59 = vector.load %arg10[%c0_22, %c0_23] : memref<3x32xf32, #tpu.memory_space<vmem>>, vector<3x32xf32>
    %cst_24 = arith.constant dense<0.000000e+00> : vector<3x128xf32>
    %60 = tpu.matmul %59, %58, %cst_24 {dimension_numbers = #tpu.dot_dimension_numbers<[1], [0], [0], [1], [0, 0, 1, 1], [], []>} : vector<3x32xf32>, vector<32x128xf32>, vector<3x128xf32> -> vector<3x128xf32>
    %c0_25 = arith.constant 0 : index
    %c0_26 = arith.constant 0 : index
    %61 = vector.load %arg11[%c0_25, %c0_26] : memref<3x1xf32, #tpu.memory_space<vmem>>, vector<3x1xf32>
    %62 = vector.broadcast %61 : vector<3x1xf32> to vector<3x128xf32>
    %63 = arith.addf %60, %62 : vector<3x128xf32>
    %64 = math.exp %63 : vector<3x128xf32>
    %c0_27 = arith.constant 0 : index
    %c0_28 = arith.constant 0 : index
    %c0_29 = arith.constant 0 : index
    %65 = vector.load %arg12[%c0_27, %c0_28, %c0_29] : memref<1x3x128xf32, #tpu.memory_space<vmem>>, vector<1x3x128xf32>
    %66 = vector.shape_cast %65 : vector<1x3x128xf32> to vector<3x128xf32>
    %67 = vector.shape_cast %64 : vector<3x128xf32> to vector<1x3x128xf32>
    tpu.vector_store %arg12[%c0_27, %c0_28, %c0_29], %67 {strides = array<i32>} : memref<1x3x128xf32, #tpu.memory_space<vmem>>, vector<1x3x128xf32>,
    return
  }
  func.func @transform_0(%arg0: i32) -> (i32, i32, i32) {
    %c0_i32 = arith.constant 0 : i32
    %c0_i32_0 = arith.constant 0 : i32
    %c0_i32_1 = arith.constant 0 : i32
    return %arg0, %c0_i32, %c0_i32_0 : i32, i32, i32
  }
  func.func @transform_1(%arg0: i32) -> (i32, i32, i32) {
    %c0_i32 = arith.constant 0 : i32
    %c0_i32_0 = arith.constant 0 : i32
    %c0_i32_1 = arith.constant 0 : i32
    return %arg0, %c0_i32, %c0_i32_0 : i32, i32, i32
  }
  func.func @transform_2(%arg0: i32) -> (i32, i32, i32) {
    %c0_i32 = arith.constant 0 : i32
    %c0_i32_0 = arith.constant 0 : i32
    %c0_i32_1 = arith.constant 0 : i32
    return %arg0, %c0_i32, %c0_i32_0 : i32, i32, i32
  }
  func.func @transform_3(%arg0: i32) -> (i32, i32, i32) {
    %c0_i32 = arith.constant 0 : i32
    %c0_i32_0 = arith.constant 0 : i32
    %c0_i32_1 = arith.constant 0 : i32
    return %arg0, %c0_i32, %c0_i32_0 : i32, i32, i32
  }
  func.func @transform_4(%arg0: i32) -> (i32, i32) {
    %c0_i32 = arith.constant 0 : i32
    %c0_i32_0 = arith.constant 0 : i32
    %c0_i32_1 = arith.constant 0 : i32
    return %c0_i32, %c0_i32_0 : i32, i32
  }
  func.func @transform_5(%arg0: i32) -> (i32, i32) {
    %c0_i32 = arith.constant 0 : i32
    %c0_i32_0 = arith.constant 0 : i32
    %c0_i32_1 = arith.constant 0 : i32
    return %c0_i32, %c0_i32_0 : i32, i32
  }
  func.func @transform_6(%arg0: i32) -> (i32, i32) {
    %c0_i32 = arith.constant 0 : i32
    %c0_i32_0 = arith.constant 0 : i32
    %c0_i32_1 = arith.constant 0 : i32
    return %c0_i32, %c0_i32_0 : i32, i32
  }
  func.func @transform_7(%arg0: i32) -> (i32, i32) {
    %c0_i32 = arith.constant 0 : i32
    %c0_i32_0 = arith.constant 0 : i32
    %c0_i32_1 = arith.constant 0 : i32
    return %c0_i32, %c0_i32_0 : i32, i32
  }
  func.func @transform_8(%arg0: i32) -> (i32, i32) {
    %c0_i32 = arith.constant 0 : i32
    %c0_i32_0 = arith.constant 0 : i32
    %c0_i32_1 = arith.constant 0 : i32
    return %c0_i32, %c0_i32_0 : i32, i32
  }
  func.func @transform_9(%arg0: i32) -> (i32, i32) {
    %c0_i32 = arith.constant 0 : i32
    %c0_i32_0 = arith.constant 0 : i32
    %c0_i32_1 = arith.constant 0 : i32
    return %c0_i32, %c0_i32_0 : i32, i32
  }
  func.func @transform_10(%arg0: i32) -> (i32, i32) {
    %c0_i32 = arith.constant 0 : i32
    %c0_i32_0 = arith.constant 0 : i32
    %c0_i32_1 = arith.constant 0 : i32
    return %c0_i32, %c0_i32_0 : i32, i32
  }
  func.func @transform_11(%arg0: i32) -> (i32, i32, i32) {
    %c0_i32 = arith.constant 0 : i32
    %c0_i32_0 = arith.constant 0 : i32
    %c0_i32_1 = arith.constant 0 : i32
    return %arg0, %c0_i32, %c0_i32_0 : i32, i32, i32
  }
}

</mosaic_0001>

<llo_original>
// kernel: tpu_custom_call.1
$region0: #{tpu_custom_call.1}
  #allocation0 [shape = 'u32[]', space=smem, size = 0x4, offset = 0x4, fixed_abs, tag = 'smem constant byte address 0x4 - core index']
  #allocation1 [shape = 'u32[144,128]{1,0:T(1,128)}', space=vmem, size = 0x12000, scoped, tag = 'internal scratch']
  %s0 = inlined_call_operand.vmem [shape: f32[2,3,128], index: 0, kind: input, shape index: {}]
  %s1 = inlined_call_operand.vmem [shape: f32[2,32,3], index: 1, kind: input, shape index: {}]
  %s2 = inlined_call_operand.vmem [shape: f32[2,96,1], index: 2, kind: input, shape index: {}]
  %s3 = inlined_call_operand.vmem [shape: f32[2,96,1], index: 3, kind: input, shape index: {}]
  %s4 = inlined_call_operand.vmem [shape: f32[32,1], index: 4, kind: input, shape index: {}]
  %s5 = inlined_call_operand.vmem [shape: f32[32,32], index: 5, kind: input, shape index: {}]
  %s6 = inlined_call_operand.vmem [shape: f32[32,1], index: 6, kind: input, shape index: {}]
  %s7 = inlined_call_operand.vmem [shape: f32[32,32], index: 7, kind: input, shape index: {}]
  %s8 = inlined_call_operand.vmem [shape: f32[32,1], index: 8, kind: input, shape index: {}]
  %s9 = inlined_call_operand.vmem [shape: f32[3,32], index: 9, kind: input, shape index: {}]
  %s10 = inlined_call_operand.vmem [shape: f32[3,1], index: 10, kind: input, shape index: {}]
  %s11 = inlined_call_operand.vmem [shape: f32[2,3,128], index: 11, kind: output, shape index: {}]
  %s12 = sld [smem:[#allocation0]]
  $region77: #{tpu_custom_call.1} parent=0
    _
  %s14 = ssub.s32 1, %s12
  %s15 = scalar_select 0, %s14, %s12
  loop: start=0, step=1, limit=4
  $region2: #{tpu_custom_call.1} parent=0 // loop_pre_header
    _
  $region3: #{tpu_custom_call.1} parent=0 // loop_header
    %s17 = sphi 0, %s21
    %p18 = scmp.ge.s32.totalorder %s17, 4
    %s27 = sphi 0, %s29
    %s30 = sphi 0, %s27
    %s31 = sphi 0, %s30
    %s47 = sphi 0, %s31
    %s53 = sphi 0, %s55
    %s56 = sphi 0, %s53
    %s57 = sphi 0, %s56
    %s73 = sphi 0, %s57
    %s79 = sphi 0, %s81
    %s82 = sphi 0, %s79
    %s83 = sphi 0, %s82
    %s99 = sphi 0, %s83
    %s105 = sphi 0, %s107
    %s108 = sphi 0, %s105
    %s109 = sphi 0, %s108
    %s125 = sphi 0, %s109
    %s129 = sphi 0, %s129
    %s131 = sphi 0, %s129
    %s132 = sphi 0, %s131
    %s146 = sphi 0, %s132
    %s150 = sphi 0, %s150
    %s152 = sphi 0, %s150
    %s153 = sphi 0, %s152
    %s167 = sphi 0, %s153
    %s171 = sphi 0, %s171
    %s173 = sphi 0, %s171
    %s174 = sphi 0, %s173
    %s188 = sphi 0, %s174
    %s192 = sphi 0, %s192
    %s194 = sphi 0, %s192
    %s195 = sphi 0, %s194
    %s209 = sphi 0, %s195
    %s213 = sphi 0, %s213
    %s215 = sphi 0, %s213
    %s216 = sphi 0, %s215
    %s230 = sphi 0, %s216
    %s234 = sphi 0, %s234
    %s236 = sphi 0, %s234
    %s237 = sphi 0, %s236
    %s251 = sphi 0, %s237
    %s255 = sphi 0, %s255
    %s257 = sphi 0, %s255
    %s258 = sphi 0, %s257
    %s272 = sphi 0, %s258
    %s278 = sphi 0, %s280
    %s281 = sphi 0, %s278
    %s282 = sphi 0, %s281
    %s298 = sphi 0, %s282
  $region4: #{tpu_custom_call.1} parent=0 // loop_header_branch
    %20 = sbr.rel (%p18) target = $region8
  $region5: #{tpu_custom_call.1} parent=0 // loop_body
    %s22 = ssub.s32 %s17, 1
    %s23 = ssub.s32 %s17, 2
    %s24 = sadd.s32 %s17, 1
    %s25 = ssub.s32 %s17, %s24
    %p26 = scmp.eq.s32.totalorder %s25, 0
    %s28 = sadd.s32 %s27, 1
    %s29 = scalar_select %p26, %s27, %s28
    %p32 = pneg %p26
    %p33 = scmp.eq.s32.totalorder %s17, 1
    %p34 = por %p32, %p33
    %p35 = scmp.ne.s32.totalorder %s27, %s30
    %p36 = scmp.eq.s32.totalorder %s17, 0
    %p37 = por %p35, %p36
    %p38 = scmp.ne.s32.totalorder %s27, %s30
    %p39 = scmp.eq.s32.totalorder %s22, 1
    %p40 = por %p38, %p39
    %p41 = scmp.ne.s32.totalorder %s30, %s31
    %p42 = scmp.eq.s32.totalorder %s22, 0
    %p43 = por %p41, %p42
    %p44 = scmp.ne.s32.totalorder %s30, %s31
    %p45 = scmp.eq.s32.totalorder %s23, 1
    %p46 = por %p44, %p45
    %p48 = scmp.ne.s32.totalorder %s31, %s47
    %p49 = scmp.eq.s32.totalorder %s23, 0
    %p50 = por %p48, %p49
    %s51 = ssub.s32 %s17, %s24
    %p52 = scmp.eq.s32.totalorder %s51, 0
    %s54 = sadd.s32 %s53, 1
    %s55 = scalar_select %p52, %s53, %s54
    %p58 = pneg %p52
    %p59 = scmp.eq.s32.totalorder %s17, 1
    %p60 = por %p58, %p59
    %p61 = scmp.ne.s32.totalorder %s53, %s56
    %p62 = scmp.eq.s32.totalorder %s17, 0
    %p63 = por %p61, %p62
    %p64 = scmp.ne.s32.totalorder %s53, %s56
    %p65 = scmp.eq.s32.totalorder %s22, 1
    %p66 = por %p64, %p65
    %p67 = scmp.ne.s32.totalorder %s56, %s57
    %p68 = scmp.eq.s32.totalorder %s22, 0
    %p69 = por %p67, %p68
    %p70 = scmp.ne.s32.totalorder %s56, %s57
    %p71 = scmp.eq.s32.totalorder %s23, 1
    %p72 = por %p70, %p71
    %p74 = scmp.ne.s32.totalorder %s57, %s73
    %p75 = scmp.eq.s32.totalorder %s23, 0
    %p76 = por %p74, %p75
    %s77 = ssub.s32 %s17, %s24
    %p78 = scmp.eq.s32.totalorder %s77, 0
    %s80 = sadd.s32 %s79, 1
    %s81 = scalar_select %p78, %s79, %s80
    %p84 = pneg %p78
    %p85 = scmp.eq.s32.totalorder %s17, 1
    %p86 = por %p84, %p85
    %p87 = scmp.ne.s32.totalorder %s79, %s82
    %p88 = scmp.eq.s32.totalorder %s17, 0
    %p89 = por %p87, %p88
    %p90 = scmp.ne.s32.totalorder %s79, %s82
    %p91 = scmp.eq.s32.totalorder %s22, 1
    %p92 = por %p90, %p91
    %p93 = scmp.ne.s32.totalorder %s82, %s83
    %p94 = scmp.eq.s32.totalorder %s22, 0
    %p95 = por %p93, %p94
    %p96 = scmp.ne.s32.totalorder %s82, %s83
    %p97 = scmp.eq.s32.totalorder %s23, 1
    %p98 = por %p96, %p97
    %p100 = scmp.ne.s32.totalorder %s83, %s99
    %p101 = scmp.eq.s32.totalorder %s23, 0
    %p102 = por %p100, %p101
    %s103 = ssub.s32 %s17, %s24
    %p104 = scmp.eq.s32.totalorder %s103, 0
    %s106 = sadd.s32 %s105, 1
    %s107 = scalar_select %p104, %s105, %s106
    %p110 = pneg %p104
    %p111 = scmp.eq.s32.totalorder %s17, 1
    %p112 = por %p110, %p111
    %p113 = scmp.ne.s32.totalorder %s105, %s108
    %p114 = scmp.eq.s32.totalorder %s17, 0
    %p115 = por %p113, %p114
    %p116 = scmp.ne.s32.totalorder %s105, %s108
    %p117 = scmp.eq.s32.totalorder %s22, 1
    %p118 = por %p116, %p117
    %p119 = scmp.ne.s32.totalorder %s108, %s109
    %p120 = scmp.eq.s32.totalorder %s22, 0
    %p121 = por %p119, %p120
    %p122 = scmp.ne.s32.totalorder %s108, %s109
    %p123 = scmp.eq.s32.totalorder %s23, 1
    %p124 = por %p122, %p123
    %p126 = scmp.ne.s32.totalorder %s109, %s125
    %p127 = scmp.eq.s32.totalorder %s23, 0
    %p128 = por %p126, %p127
    %s130 = sadd.s32 %s129, 1
    %p133 = scmp.eq.s32.totalorder %s17, 1
    %p134 = scmp.ne.s32.totalorder %s129, %s131
    %p135 = scmp.eq.s32.totalorder %s17, 0
    %p136 = por %p134, %p135
    %p137 = scmp.ne.s32.totalorder %s129, %s131
    %p138 = scmp.eq.s32.totalorder %s22, 1
    %p139 = por %p137, %p138
    %p140 = scmp.ne.s32.totalorder %s131, %s132
    %p141 = scmp.eq.s32.totalorder %s22, 0
    %p142 = por %p140, %p141
    %p143 = scmp.ne.s32.totalorder %s131, %s132
    %p144 = scmp.eq.s32.totalorder %s23, 1
    %p145 = por %p143, %p144
    %p147 = scmp.ne.s32.totalorder %s132, %s146
    %p148 = scmp.eq.s32.totalorder %s23, 0
    %p149 = por %p147, %p148
    %s151 = sadd.s32 %s150, 1
    %p154 = scmp.eq.s32.totalorder %s17, 1
    %p155 = scmp.ne.s32.totalorder %s150, %s152
    %p156 = scmp.eq.s32.totalorder %s17, 0
    %p157 = por %p155, %p156
    %p158 = scmp.ne.s32.totalorder %s150, %s152
    %p159 = scmp.eq.s32.totalorder %s22, 1
    %p160 = por %p158, %p159
    %p161 = scmp.ne.s32.totalorder %s152, %s153
    %p162 = scmp.eq.s32.totalorder %s22, 0
    %p163 = por %p161, %p162
    %p164 = scmp.ne.s32.totalorder %s152, %s153
    %p165 = scmp.eq.s32.totalorder %s23, 1
    %p166 = por %p164, %p165
    %p168 = scmp.ne.s32.totalorder %s153, %s167
    %p169 = scmp.eq.s32.totalorder %s23, 0
    %p170 = por %p168, %p169
    %s172 = sadd.s32 %s171, 1
    %p175 = scmp.eq.s32.totalorder %s17, 1
    %p176 = scmp.ne.s32.totalorder %s171, %s173
    %p177 = scmp.eq.s32.totalorder %s17, 0
    %p178 = por %p176, %p177
    %p179 = scmp.ne.s32.totalorder %s171, %s173
    %p180 = scmp.eq.s32.totalorder %s22, 1
    %p181 = por %p179, %p180
    %p182 = scmp.ne.s32.totalorder %s173, %s174
    %p183 = scmp.eq.s32.totalorder %s22, 0
    %p184 = por %p182, %p183
    %p185 = scmp.ne.s32.totalorder %s173, %s174
    %p186 = scmp.eq.s32.totalorder %s23, 1
    %p187 = por %p185, %p186
    %p189 = scmp.ne.s32.totalorder %s174, %s188
    %p190 = scmp.eq.s32.totalorder %s23, 0
    %p191 = por %p189, %p190
    %s193 = sadd.s32 %s192, 1
    %p196 = scmp.eq.s32.totalorder %s17, 1
    %p197 = scmp.ne.s32.totalorder %s192, %s194
    %p198 = scmp.eq.s32.totalorder %s17, 0
    %p199 = por %p197, %p198
    %p200 = scmp.ne.s32.totalorder %s192, %s194
    %p201 = scmp.eq.s32.totalorder %s22, 1
    %p202 = por %p200, %p201
    %p203 = scmp.ne.s32.totalorder %s194, %s195
    %p204 = scmp.eq.s32.totalorder %s22, 0
    %p205 = por %p203, %p204
    %p206 = scmp.ne.s32.totalorder %s194, %s195
    %p207 = scmp.eq.s32.totalorder %s23, 1
    %p208 = por %p206, %p207
    %p210 = scmp.ne.s32.totalorder %s195, %s209
    %p211 = scmp.eq.s32.totalorder %s23, 0
    %p212 = por %p210, %p211
    %s214 = sadd.s32 %s213, 1
    %p217 = scmp.eq.s32.totalorder %s17, 1
    %p218 = scmp.ne.s32.totalorder %s213, %s215
    %p219 = scmp.eq.s32.totalorder %s17, 0
    %p220 = por %p218, %p219
    %p221 = scmp.ne.s32.totalorder %s213, %s215
    %p222 = scmp.eq.s32.totalorder %s22, 1
    %p223 = por %p221, %p222
    %p224 = scmp.ne.s32.totalorder %s215, %s216
    %p225 = scmp.eq.s32.totalorder %s22, 0
    %p226 = por %p224, %p225
    %p227 = scmp.ne.s32.totalorder %s215, %s216
    %p228 = scmp.eq.s32.totalorder %s23, 1
    %p229 = por %p227, %p228
    %p231 = scmp.ne.s32.totalorder %s216, %s230
    %p232 = scmp.eq.s32.totalorder %s23, 0
    %p233 = por %p231, %p232
    %s235 = sadd.s32 %s234, 1
    %p238 = scmp.eq.s32.totalorder %s17, 1
    %p239 = scmp.ne.s32.totalorder %s234, %s236
    %p240 = scmp.eq.s32.totalorder %s17, 0
    %p241 = por %p239, %p240
    %p242 = scmp.ne.s32.totalorder %s234, %s236
    %p243 = scmp.eq.s32.totalorder %s22, 1
    %p244 = por %p242, %p243
    %p245 = scmp.ne.s32.totalorder %s236, %s237
    %p246 = scmp.eq.s32.totalorder %s22, 0
    %p247 = por %p245, %p246
    %p248 = scmp.ne.s32.totalorder %s236, %s237
    %p249 = scmp.eq.s32.totalorder %s23, 1
    %p250 = por %p248, %p249
    %p252 = scmp.ne.s32.totalorder %s237, %s251
    %p253 = scmp.eq.s32.totalorder %s23, 0
    %p254 = por %p252, %p253
    %s256 = sadd.s32 %s255, 1
    %p259 = scmp.eq.s32.totalorder %s17, 1
    %p260 = scmp.ne.s32.totalorder %s255, %s257
    %p261 = scmp.eq.s32.totalorder %s17, 0
    %p262 = por %p260, %p261
    %p263 = scmp.ne.s32.totalorder %s255, %s257
    %p264 = scmp.eq.s32.totalorder %s22, 1
    %p265 = por %p263, %p264
    %p266 = scmp.ne.s32.totalorder %s257, %s258
    %p267 = scmp.eq.s32.totalorder %s22, 0
    %p268 = por %p266, %p267
    %p269 = scmp.ne.s32.totalorder %s257, %s258
    %p270 = scmp.eq.s32.totalorder %s23, 1
    %p271 = por %p269, %p270
    %p273 = scmp.ne.s32.totalorder %s258, %s272
    %p274 = scmp.eq.s32.totalorder %s23, 0
    %p275 = por %p273, %p274
    %s276 = ssub.s32 %s17, %s24
    %p277 = scmp.eq.s32.totalorder %s276, 0
    %s279 = sadd.s32 %s278, 1
    %s280 = scalar_select %p277, %s278, %s279
    %p283 = pneg %p277
    %p284 = scmp.eq.s32.totalorder %s17, 1
    %p285 = por %p283, %p284
    %p286 = scmp.ne.s32.totalorder %s278, %s281
    %p287 = scmp.eq.s32.totalorder %s17, 0
    %p288 = por %p286, %p287
    %p289 = scmp.ne.s32.totalorder %s278, %s281
    %p290 = scmp.eq.s32.totalorder %s22, 1
    %p291 = por %p289, %p290
    %p292 = scmp.ne.s32.totalorder %s281, %s282
    %p293 = scmp.eq.s32.totalorder %s22, 0
    %p294 = por %p292, %p293
    %p295 = scmp.ne.s32.totalorder %s281, %s282
    %p296 = scmp.eq.s32.totalorder %s23, 1
    %p297 = por %p295, %p296
    %p299 = scmp.ne.s32.totalorder %s282, %s298
    %p300 = scmp.eq.s32.totalorder %s23, 0
    %p301 = por %p299, %p300
    %p302 = scmp.le.s32.totalorder 1, %s17
    %p303 = scmp.lt.s32.totalorder %s17, 3
    %p304 = pnand %p302, %p303
    %p305 = pneg %p304
    // Predicated region
    $region9: #{tpu_custom_call.1} parent=5 // pred_check
      _
    $region10: #{tpu_custom_call.1} parent=5 // pred_check_branch
      %307 = sbr.rel (%p304) target = $region12
    $region11: #{tpu_custom_call.1} parent=5 // pred_region
      %s308 = ssub.s32 %s17, 1
      // Predicated region
      $region13: #{tpu_custom_call.1} parent=11 // pred_check
        %p309 = pneg %p142
      $region14: #{tpu_custom_call.1} parent=11 // pred_check_branch
        %311 = sbr.rel (%p309) target = $region16
      $region15: #{tpu_custom_call.1} parent=11 // pred_region
        _
      $region16: #{tpu_custom_call.1} parent=11 // pred_fallthru
        _
      // Predicated region
      $region17: #{tpu_custom_call.1} parent=11 // pred_check
        %p312 = pneg %p163
      $region18: #{tpu_custom_call.1} parent=11 // pred_check_branch
        %314 = sbr.rel (%p312) target = $region20
      $region19: #{tpu_custom_call.1} parent=11 // pred_region
        _
      $region20: #{tpu_custom_call.1} parent=11 // pred_fallthru
        _
      // Predicated region
      $region21: #{tpu_custom_call.1} parent=11 // pred_check
        %p315 = pneg %p184
      $region22: #{tpu_custom_call.1} parent=11 // pred_check_branch
        %317 = sbr.rel (%p315) target = $region24
      $region23: #{tpu_custom_call.1} parent=11 // pred_region
        _
      $region24: #{tpu_custom_call.1} parent=11 // pred_fallthru
        _
      // Predicated region
      $region25: #{tpu_custom_call.1} parent=11 // pred_check
        %p318 = pneg %p205
      $region26: #{tpu_custom_call.1} parent=11 // pred_check_branch
        %320 = sbr.rel (%p318) target = $region28
      $region27: #{tpu_custom_call.1} parent=11 // pred_region
        _
      $region28: #{tpu_custom_call.1} parent=11 // pred_fallthru
        _
      // Predicated region
      $region29: #{tpu_custom_call.1} parent=11 // pred_check
        %p321 = pneg %p226
      $region30: #{tpu_custom_call.1} parent=11 // pred_check_branch
        %323 = sbr.rel (%p321) target = $region32
      $region31: #{tpu_custom_call.1} parent=11 // pred_region
        _
      $region32: #{tpu_custom_call.1} parent=11 // pred_fallthru
        _
      // Predicated region
      $region33: #{tpu_custom_call.1} parent=11 // pred_check
        %p324 = pneg %p247
      $region34: #{tpu_custom_call.1} parent=11 // pred_check_branch
        %326 = sbr.rel (%p324) target = $region36
      $region35: #{tpu_custom_call.1} parent=11 // pred_region
        _
      $region36: #{tpu_custom_call.1} parent=11 // pred_fallthru
        _
      // Predicated region
      $region37: #{tpu_custom_call.1} parent=11 // pred_check
        %p327 = pneg %p268
      $region38: #{tpu_custom_call.1} parent=11 // pred_check_branch
        %329 = sbr.rel (%p327) target = $region40
      $region39: #{tpu_custom_call.1} parent=11 // pred_region
        _
      $region40: #{tpu_custom_call.1} parent=11 // pred_fallthru
        _
    $region12: #{tpu_custom_call.1} parent=5 // pred_fallthru
      _
    %p330 = scmp.lt.s32.totalorder %s17, 2
    // Predicated region
    $region41: #{tpu_custom_call.1} parent=5 // pred_check
      %p331 = pneg %p330
    $region42: #{tpu_custom_call.1} parent=5 // pred_check_branch
      %333 = sbr.rel (%p331) target = $region44
    $region43: #{tpu_custom_call.1} parent=5 // pred_region
      // Predicated region
      $region45: #{tpu_custom_call.1} parent=43 // pred_check
        %p334 = pneg %p37
      $region46: #{tpu_custom_call.1} parent=43 // pred_check_branch
        %336 = sbr.rel (%p334) target = $region48
      $region47: #{tpu_custom_call.1} parent=43 // pred_region
        %p337 = scmp.lt.s32.totalorder %s17, 1
        %s338 = scalar_select %p337, %s17, 1
        %s339 = smul.addr %s338, 4
        %s340 = scalar_lea.vmem %s0, %s339
      $region48: #{tpu_custom_call.1} parent=43 // pred_fallthru
        _
      // Predicated region
      $region49: #{tpu_custom_call.1} parent=43 // pred_check
        %p341 = pneg %p63
      $region50: #{tpu_custom_call.1} parent=43 // pred_check_branch
        %343 = sbr.rel (%p341) target = $region52
      $region51: #{tpu_custom_call.1} parent=43 // pred_region
        %p344 = scmp.lt.s32.totalorder %s17, 1
        %s345 = scalar_select %p344, %s17, 1
        %s346 = smul.addr %s345, 4
        %s347 = smul.addr %s346, 8
        %s348 = scalar_lea.vmem %s1, %s347
      $region52: #{tpu_custom_call.1} parent=43 // pred_fallthru
        _
      // Predicated region
      $region53: #{tpu_custom_call.1} parent=43 // pred_check
        %p349 = pneg %p89
      $region54: #{tpu_custom_call.1} parent=43 // pred_check_branch
        %351 = sbr.rel (%p349) target = $region56
      $region55: #{tpu_custom_call.1} parent=43 // pred_region
        %p352 = scmp.lt.s32.totalorder %s17, 1
        %s353 = scalar_select %p352, %s17, 1
        %s354 = smul.addr %s353, 12
        %s355 = smul.addr %s354, 8
        %s356 = scalar_lea.vmem %s2, %s355
      $region56: #{tpu_custom_call.1} parent=43 // pred_fallthru
        _
      // Predicated region
      $region57: #{tpu_custom_call.1} parent=43 // pred_check
        %p357 = pneg %p115
      $region58: #{tpu_custom_call.1} parent=43 // pred_check_branch
        %359 = sbr.rel (%p357) target = $region60
      $region59: #{tpu_custom_call.1} parent=43 // pred_region
        %p360 = scmp.lt.s32.totalorder %s17, 1
        %s361 = scalar_select %p360, %s17, 1
        %s362 = smul.addr %s361, 12
        %s363 = smul.addr %s362, 8
        %s364 = scalar_lea.vmem %s3, %s363
      $region60: #{tpu_custom_call.1} parent=43 // pred_fallthru
        _
    $region44: #{tpu_custom_call.1} parent=5 // pred_fallthru
      _
    %p365 = scmp.le.s32.totalorder 1, %s17
    %p366 = scmp.lt.s32.totalorder %s17, 3
    %p367 = pnand %p365, %p366
    %p368 = pneg %p367
    // Predicated region
    $region61: #{tpu_custom_call.1} parent=5 // pred_check
      _
    $region62: #{tpu_custom_call.1} parent=5 // pred_check_branch
      %370 = sbr.rel (%p367) target = $region64
    $region63: #{tpu_custom_call.1} parent=5 // pred_region
      %s371 = ssub.s32 %s17, 1
      %p372 = scmp.lt.s32.totalorder %s22, 1
      %s373 = scalar_select %p372, %s22, 1
      %s374 = smul.addr %s373, 4
      %s375 = scalar_lea.vmem %s0, %s374
      %p376 = pneg %p43
      %p377 = pneg %p40
      %p378 = scmp.lt.s32.totalorder %s22, 1
      %s379 = scalar_select %p378, %s22, 1
      %s380 = smul.addr %s379, 4
      %s381 = smul.addr %s380, 8
      %s382 = scalar_lea.vmem %s1, %s381
      %p383 = pneg %p69
      %p384 = pneg %p66
      %p385 = scmp.lt.s32.totalorder %s22, 1
      %s386 = scalar_select %p385, %s22, 1
      %s387 = smul.addr %s386, 12
      %s388 = smul.addr %s387, 8
      %s389 = scalar_lea.vmem %s2, %s388
      %p390 = pneg %p95
      %p391 = pneg %p92
      %p392 = scmp.lt.s32.totalorder %s22, 1
      %s393 = scalar_select %p392, %s22, 1
      %s394 = smul.addr %s393, 12
      %s395 = smul.addr %s394, 8
      %s396 = scalar_lea.vmem %s3, %s395
      %p397 = pneg %p121
      %p398 = pneg %p118
      %p399 = pneg %p142
      %p400 = pneg %p139
      %p401 = pneg %p163
      %p402 = pneg %p160
      %p403 = pneg %p184
      %p404 = pneg %p181
      %p405 = pneg %p205
      %p406 = pneg %p202
      %p407 = pneg %p226
      %p408 = pneg %p223
      %p409 = pneg %p247
      %p410 = pneg %p244
      %p411 = pneg %p268
      %p412 = pneg %p265
      %p413 = pneg %p294
      %p414 = pneg %p291
      %p415 = scmp.lt.s32.totalorder %s22, 1
      %s416 = scalar_select %p415, %s22, 1
      %s417 = smul.addr %s416, 4
      %s418 = scalar_lea.vmem %s11, %s417
      %p419 = scmp.lt.s32.totalorder %s22, 1
      %s420 = scalar_select %p419, %s22, 1
      %s421 = smul.addr %s420, 4
      %s422 = scalar_lea.vmem %s0, %s421
      %p423 = scmp.lt.s32.totalorder %s22, 1
      %s424 = scalar_select %p423, %s22, 1
      %s425 = smul.addr %s424, 4
      %s426 = smul.addr %s425, 8
      %s427 = scalar_lea.vmem %s1, %s426
      %p428 = scmp.lt.s32.totalorder %s22, 1
      %s429 = scalar_select %p428, %s22, 1
      %s430 = smul.addr %s429, 12
      %s431 = smul.addr %s430, 8
      %s432 = scalar_lea.vmem %s2, %s431
      %p433 = scmp.lt.s32.totalorder %s22, 1
      %s434 = scalar_select %p433, %s22, 1
      %s435 = smul.addr %s434, 12
      %s436 = smul.addr %s435, 8
      %s437 = scalar_lea.vmem %s3, %s436
      %p438 = scmp.lt.s32.totalorder %s22, 1
      %s439 = scalar_select %p438, %s22, 1
      %s440 = smul.addr %s439, 4
      %s441 = scalar_lea.vmem %s11, %s440
      %v442 = vld [vmem:[%s422] sm:$0x7]
      %v443 = vld [vmem:[%s427] sm:$0xff]
      %v444 = vld [vmem:[%s427 + $0x8] sm:$0xff]
      %v445 = vld [vmem:[%s427 + $0x10] sm:$0xff]
      %v446 = vld [vmem:[%s427 + $0x18] sm:$0xff]
      %v447 = vld [vmem:[%s432] sm:$0xff]
      %v448 = vld [vmem:[%s432 + $0x8] sm:$0xff]
      %v449 = vld [vmem:[%s432 + $0x10] sm:$0xff]
      %v450 = vld [vmem:[%s432 + $0x18] sm:$0xff]
      %v451 = vld [vmem:[%s432 + $0x20] sm:$0xff]
      %v452 = vld [vmem:[%s432 + $0x28] sm:$0xff]
      %v453 = vld [vmem:[%s432 + $0x30] sm:$0xff]
      %v454 = vld [vmem:[%s432 + $0x38] sm:$0xff]
      %v455 = vld [vmem:[%s432 + $0x40] sm:$0xff]
      %v456 = vld [vmem:[%s432 + $0x48] sm:$0xff]
      %v457 = vld [vmem:[%s432 + $0x50] sm:$0xff]
      %v458 = vld [vmem:[%s432 + $0x58] sm:$0xff]
      %v459 = vld [vmem:[%s437] sm:$0xff]
      %v460 = vld [vmem:[%s437 + $0x8] sm:$0xff]
      %v461 = vld [vmem:[%s437 + $0x10] sm:$0xff]
      %v462 = vld [vmem:[%s437 + $0x18] sm:$0xff]
      %v463 = vld [vmem:[%s437 + $0x20] sm:$0xff]
      %v464 = vld [vmem:[%s437 + $0x28] sm:$0xff]
      %v465 = vld [vmem:[%s437 + $0x30] sm:$0xff]
      %v466 = vld [vmem:[%s437 + $0x38] sm:$0xff]
      %v467 = vld [vmem:[%s437 + $0x40] sm:$0xff]
      %v468 = vld [vmem:[%s437 + $0x48] sm:$0xff]
      %v469 = vld [vmem:[%s437 + $0x50] sm:$0xff]
      %v470 = vld [vmem:[%s437 + $0x58] sm:$0xff]
      %472 = vset.pattern.permute.xlu0 0
      %473 = vperm.xlu0 %472, %v443
      %v474 = vpop.permute.xlu0 %473
      %477 = vset.pattern.permute.xlu0 0
      %478 = vperm.xlu0 %477, %v444
      %v479 = vpop.permute.xlu0 %478
      %482 = vset.pattern.permute.xlu0 0
      %483 = vperm.xlu0 %482, %v445
      %v484 = vpop.permute.xlu0 %483
      %487 = vset.pattern.permute.xlu0 0
      %488 = vperm.xlu0 %487, %v446
      %v489 = vpop.permute.xlu0 %488
      %v491 = vlaneseq
      %v492 = vshrl.u32 %v491, 7
      %v493 = vsub.s32 0, %v492
      %v494 = vrot.slane %v442, %v493
      %v495 = vmul.f32 %v474, %v494
      %v496 = vmul.f32 %v479, %v494
      %v497 = vmul.f32 %v484, %v494
      %v498 = vmul.f32 %v489, %v494
      %499 = vset.pattern.permute.xlu0 1
      %500 = vperm.xlu0 %499, %v443
      %v501 = vpop.permute.xlu0 %500
      %503 = vset.pattern.permute.xlu0 1
      %504 = vperm.xlu0 %503, %v444
      %v505 = vpop.permute.xlu0 %504
      %507 = vset.pattern.permute.xlu0 1
      %508 = vperm.xlu0 %507, %v445
      %v509 = vpop.permute.xlu0 %508
      %511 = vset.pattern.permute.xlu0 1
      %512 = vperm.xlu0 %511, %v446
      %v513 = vpop.permute.xlu0 %512
      %v515 = vlaneseq
      %v516 = vshrl.u32 %v515, 7
      %v517 = vsub.s32 1, %v516
      %v518 = vrot.slane %v442, %v517
      %v519 = vmul.f32 %v501, %v518
      %v520 = vmul.f32 %v505, %v518
      %v521 = vmul.f32 %v509, %v518
      %v522 = vmul.f32 %v513, %v518
      %v523 = vadd.f32 %v495, %v519
      %v524 = vadd.f32 %v496, %v520
      %v525 = vadd.f32 %v497, %v521
      %v526 = vadd.f32 %v498, %v522
      %527 = vset.pattern.permute.xlu0 2
      %528 = vperm.xlu0 %527, %v443
      %v529 = vpop.permute.xlu0 %528
      %531 = vset.pattern.permute.xlu0 2
      %532 = vperm.xlu0 %531, %v444
      %v533 = vpop.permute.xlu0 %532
      %535 = vset.pattern.permute.xlu0 2
      %536 = vperm.xlu0 %535, %v445
      %v537 = vpop.permute.xlu0 %536
      %539 = vset.pattern.permute.xlu0 2
      %540 = vperm.xlu0 %539, %v446
      %v541 = vpop.permute.xlu0 %540
      %v543 = vlaneseq
      %v544 = vshrl.u32 %v543, 7
      %v545 = vsub.s32 2, %v544
      %v546 = vrot.slane %v442, %v545
      %v547 = vmul.f32 %v529, %v546
      %v548 = vmul.f32 %v533, %v546
      %v549 = vmul.f32 %v537, %v546
      %v550 = vmul.f32 %v541, %v546
      %v551 = vadd.f32 %v523, %v547
      %v552 = vadd.f32 %v524, %v548
      %v553 = vadd.f32 %v525, %v549
      %v554 = vadd.f32 %v526, %v550
      %v555 = vld [vmem:[%s4] sm:$0xff]
      %v556 = vld [vmem:[%s4 + $0x8] sm:$0xff]
      %v557 = vld [vmem:[%s4 + $0x10] sm:$0xff]
      %v558 = vld [vmem:[%s4 + $0x18] sm:$0xff]
      %560 = vset.pattern.permute.xlu0 0
      %561 = vperm.xlu0 %560, %v555
      %v562 = vpop.permute.xlu0 %561
      %565 = vset.pattern.permute.xlu0 0
      %566 = vperm.xlu0 %565, %v556
      %v567 = vpop.permute.xlu0 %566
      %570 = vset.pattern.permute.xlu0 0
      %571 = vperm.xlu0 %570, %v557
      %v572 = vpop.permute.xlu0 %571
      %575 = vset.pattern.permute.xlu0 0
      %576 = vperm.xlu0 %575, %v558
      %v577 = vpop.permute.xlu0 %576
      %v579 = vadd.f32 %v551, %v562
      %v580 = vadd.f32 %v552, %v567
      %v581 = vadd.f32 %v553, %v572
      %v582 = vadd.f32 %v554, %v577
      %584 = vset.pattern.permute.xlu0 0
      %585 = vperm.xlu0 %584, %v447
      %v586 = vpop.permute.xlu0 %585
      %589 = vset.pattern.permute.xlu0 0
      %590 = vperm.xlu0 %589, %v448
      %v591 = vpop.permute.xlu0 %590
      %594 = vset.pattern.permute.xlu0 0
      %595 = vperm.xlu0 %594, %v449
      %v596 = vpop.permute.xlu0 %595
      %599 = vset.pattern.permute.xlu0 0
      %600 = vperm.xlu0 %599, %v450
      %v601 = vpop.permute.xlu0 %600
      %v603 = vmul.f32 %v586, %v579
      %v604 = vmul.f32 %v591, %v580
      %v605 = vmul.f32 %v596, %v581
      %v606 = vmul.f32 %v601, %v582
      %608 = vset.pattern.permute.xlu0 0
      %609 = vperm.xlu0 %608, %v459
      %v610 = vpop.permute.xlu0 %609
      %613 = vset.pattern.permute.xlu0 0
      %614 = vperm.xlu0 %613, %v460
      %v615 = vpop.permute.xlu0 %614
      %618 = vset.pattern.permute.xlu0 0
      %619 = vperm.xlu0 %618, %v461
      %v620 = vpop.permute.xlu0 %619
      %623 = vset.pattern.permute.xlu0 0
      %624 = vperm.xlu0 %623, %v462
      %v625 = vpop.permute.xlu0 %624
      %v627 = vadd.f32 %v603, %v610
      %v628 = vadd.f32 %v604, %v615
      %v629 = vadd.f32 %v605, %v620
      %v630 = vadd.f32 %v606, %v625
      %v631 = vand.u32 2147483647, %v627
      %vm632 = vcmp.le.f32.partialorder %v631, 0.7853982
      %vm633 = vcmp.lt.s32.totalorder %v627, 0
      %v634 = vand.u32 %v627, 2139095040
      %v635 = vshrl.u32 %v634, 23
      %v636 = vsub.s32 %v635, 127
      %v637 = vand.u32 2147483647, %v627
      %v638 = vand.u32 %v637, 8388607
      %v639 = vor.u32 %v638, 8388608
      %v640 = vsub.s32 0, %v639
      %v641 = vadd.s32 %v636, 1
      %vm642 = vcmp.gt.s32.totalorder %v641, 0
      %v643 = vsel %vm642, %v641, 0
      %v644 = vshrl.u32 %v643, 5
      %v645 = vand.u32 %v643, 31
      %v646 = vsub.s32 32, %v645
      %v647 = vshrl.u32 683565275, %v646
      %v648 = vshll.u32 683565275, %v645
      %v649 = vshrl.u32 2475754826, %v646
      %v650 = vor.u32 %v648, %v649
      %v651 = vshll.u32 2475754826, %v645
      %v652 = vshrl.u32 2131351028, %v646
      %v653 = vor.u32 %v651, %v652
      %v654 = vshll.u32 2131351028, %v645
      %v655 = vshrl.u32 2102212464, %v646
      %v656 = vor.u32 %v654, %v655
      %v657 = vshll.u32 2102212464, %v645
      %v658 = vshrl.u32 920167782, %v646
      %v659 = vor.u32 %v657, %v658
      %v660 = vshll.u32 920167782, %v645
      %v661 = vshrl.u32 1326507024, %v646
      %v662 = vor.u32 %v660, %v661
      %vm663 = vcmp.lt.s32.totalorder %v644, 1
      %vm664 = vcmp.lt.s32.totalorder %v644, 2
      %vm665 = vcmp.lt.s32.totalorder %v644, 3
      %vm666 = vcmp.lt.s32.totalorder %v644, 4
      %v667 = vsel %vm663, %v647, %v650
      %v668 = vsel %vm666, %v656, 2102212464
      %v669 = vsel %vm665, %v653, %v668
      %v670 = vsel %vm664, %v667, %v669
      %v671 = vsel %vm663, %v650, %v653
      %v672 = vsel %vm666, %v659, 920167782
      %v673 = vsel %vm665, %v656, %v672
      %v674 = vsel %vm664, %v671, %v673
      %v675 = vsel %vm663, %v653, %v656
      %v676 = vsel %vm666, %v662, 1326507024
      %v677 = vsel %vm665, %v659, %v676
      %v678 = vsel %vm664, %v675, %v677
      %v679 = vshll.u32 %v639, 8
      %v680 = vmul.u32.u64.compose %v679, %v678
      %v681 = vextract.low.u32 %v680
      %v682 = vextract.high.u32 %v680
      %v683 = vmul.u32.u64.compose %v679, %v674
      %v684 = vextract.low.u32 %v683
      %v685 = vextract.high.u32 %v683
      %v686 = vmul.u32 %v679, %v670
      %v687 = vadd.s32 %v682, %v684
      %vm688 = vc.u32 %v682, %v684
      %v689 = vadd.s32 %v685, 1
      %v690 = vsel %vm688, %v689, %v685
      %v691 = vadd.s32 %v686, %v690
      %v692 = vadd.s32 %v691, 536870912
      %v693 = vshrl.u32 %v692, 30
      %v694 = vshll.u32 %v693, 30
      %v695 = vsub.s32 %v691, %v694
      %vm696 = vcmp.lt.s32.totalorder %v695, 0
      %v697 = vsub.s32 0, %v695
      %v698 = vsel %vm696, %v697, %v695
      %v699 = vclz %v698
      %v700 = vsub.s32 %v699, 2
      %vm701 = vcmp.gt.s32.totalorder 0, %v700
      %v702 = vsel %vm701, 0, %v700
      %v703 = vsub.s32 32, %v702
      %v704 = vshll.u32 %v695, %v702
      %v705 = vshrl.u32 %v687, %v703
      %v706 = vor.u32 %v704, %v705
      %v707 = vsub.s32 4294967266, %v702
      %v708 = vadd.s32 %v707, 127
      %v709 = vshll.u32 %v708, 23
      %v710 = vor.u32 4788187, %v709
      %v711 = vand.u32 2147483647, %v710
      %v713 = vcvt.s32.f32 %v706
      %v714 = vmul.f32 %v713, %v711
      %v715 = vxor.u32 %v714, 2147483648
      %v716 = vsel %vm633, %v715, %v714
      %v717 = vsub.s32 4, %v693
      %v718 = vsel %vm633, %v717, %v693
      %v719 = vsel %vm632, %v627, %v716
      %v720 = vsel %vm632, 0, %v718
      %v721 = vcosq.f32.pop %v719
      %v722 = vsinq.f32.pop %v719
      %vm723 = vweird.f32 %v627
      %v724 = vadd.s32 %v720, 3
      %v725 = vand.u32 %v724, 3
      %vm726 = vcmp.lt.s32.totalorder %v725, 2
      %vm727 = vcmp.eq.s32.totalorder %v725, 0
      %v728 = vxor.u32 %v722, 2147483648
      %v729 = vsel %vm727, %v721, %v728
      %vm730 = vcmp.eq.s32.totalorder %v725, 2
      %v731 = vxor.u32 %v721, 2147483648
      %v732 = vsel %vm730, %v731, %v722
      %v733 = vsel %vm726, %v729, %v732
      %v734 = vsel %vm723, nan, %v733
      %v735 = vand.u32 2147483647, %v628
      %vm736 = vcmp.le.f32.partialorder %v735, 0.7853982
      %vm737 = vcmp.lt.s32.totalorder %v628, 0
      %v738 = vand.u32 %v628, 2139095040
      %v739 = vshrl.u32 %v738, 23
      %v740 = vsub.s32 %v739, 127
      %v741 = vand.u32 2147483647, %v628
      %v742 = vand.u32 %v741, 8388607
      %v743 = vor.u32 %v742, 8388608
      %v744 = vsub.s32 0, %v743
      %v745 = vadd.s32 %v740, 1
      %vm746 = vcmp.gt.s32.totalorder %v745, 0
      %v747 = vsel %vm746, %v745, 0
      %v748 = vshrl.u32 %v747, 5
      %v749 = vand.u32 %v747, 31
      %v750 = vsub.s32 32, %v749
      %v751 = vshrl.u32 683565275, %v750
      %v752 = vshll.u32 683565275, %v749
      %v753 = vshrl.u32 2475754826, %v750
      %v754 = vor.u32 %v752, %v753
      %v755 = vshll.u32 2475754826, %v749
      %v756 = vshrl.u32 2131351028, %v750
      %v757 = vor.u32 %v755, %v756
      %v758 = vshll.u32 2131351028, %v749
      %v759 = vshrl.u32 2102212464, %v750
      %v760 = vor.u32 %v758, %v759
      %v761 = vshll.u32 2102212464, %v749
      %v762 = vshrl.u32 920167782, %v750
      %v763 = vor.u32 %v761, %v762
      %v764 = vshll.u32 920167782, %v749
      %v765 = vshrl.u32 1326507024, %v750
      %v766 = vor.u32 %v764, %v765
      %vm767 = vcmp.lt.s32.totalorder %v748, 1
      %vm768 = vcmp.lt.s32.totalorder %v748, 2
      %vm769 = vcmp.lt.s32.totalorder %v748, 3
      %vm770 = vcmp.lt.s32.totalorder %v748, 4
      %v771 = vsel %vm767, %v751, %v754
      %v772 = vsel %vm770, %v760, 2102212464
      %v773 = vsel %vm769, %v757, %v772
      %v774 = vsel %vm768, %v771, %v773
      %v775 = vsel %vm767, %v754, %v757
      %v776 = vsel %vm770, %v763, 920167782
      %v777 = vsel %vm769, %v760, %v776
      %v778 = vsel %vm768, %v775, %v777
      %v779 = vsel %vm767, %v757, %v760
      %v780 = vsel %vm770, %v766, 1326507024
      %v781 = vsel %vm769, %v763, %v780
      %v782 = vsel %vm768, %v779, %v781
      %v783 = vshll.u32 %v743, 8
      %v784 = vmul.u32.u64.compose %v783, %v782
      %v785 = vextract.low.u32 %v784
      %v786 = vextract.high.u32 %v784
      %v787 = vmul.u32.u64.compose %v783, %v778
      %v788 = vextract.low.u32 %v787
      %v789 = vextract.high.u32 %v787
      %v790 = vmul.u32 %v783, %v774
      %v791 = vadd.s32 %v786, %v788
      %vm792 = vc.u32 %v786, %v788
      %v793 = vadd.s32 %v789, 1
      %v794 = vsel %vm792, %v793, %v789
      %v795 = vadd.s32 %v790, %v794
      %v796 = vadd.s32 %v795, 536870912
      %v797 = vshrl.u32 %v796, 30
      %v798 = vshll.u32 %v797, 30
      %v799 = vsub.s32 %v795, %v798
      %vm800 = vcmp.lt.s32.totalorder %v799, 0
      %v801 = vsub.s32 0, %v799
      %v802 = vsel %vm800, %v801, %v799
      %v803 = vclz %v802
      %v804 = vsub.s32 %v803, 2
      %vm805 = vcmp.gt.s32.totalorder 0, %v804
      %v806 = vsel %vm805, 0, %v804
      %v807 = vsub.s32 32, %v806
      %v808 = vshll.u32 %v799, %v806
      %v809 = vshrl.u32 %v791, %v807
      %v810 = vor.u32 %v808, %v809
      %v811 = vsub.s32 4294967266, %v806
      %v812 = vadd.s32 %v811, 127
      %v813 = vshll.u32 %v812, 23
      %v814 = vor.u32 4788187, %v813
      %v815 = vand.u32 2147483647, %v814
      %v817 = vcvt.s32.f32 %v810
      %v818 = vmul.f32 %v817, %v815
      %v819 = vxor.u32 %v818, 2147483648
      %v820 = vsel %vm737, %v819, %v818
      %v821 = vsub.s32 4, %v797
      %v822 = vsel %vm737, %v821, %v797
      %v823 = vsel %vm736, %v628, %v820
      %v824 = vsel %vm736, 0, %v822
      %v825 = vcosq.f32.pop %v823
      %v826 = vsinq.f32.pop %v823
      %vm827 = vweird.f32 %v628
      %v828 = vadd.s32 %v824, 3
      %v829 = vand.u32 %v828, 3
      %vm830 = vcmp.lt.s32.totalorder %v829, 2
      %vm831 = vcmp.eq.s32.totalorder %v829, 0
      %v832 = vxor.u32 %v826, 2147483648
      %v833 = vsel %vm831, %v825, %v832
      %vm834 = vcmp.eq.s32.totalorder %v829, 2
      %v835 = vxor.u32 %v825, 2147483648
      %v836 = vsel %vm834, %v835, %v826
      %v837 = vsel %vm830, %v833, %v836
      %v838 = vsel %vm827, nan, %v837
      %v839 = vand.u32 2147483647, %v629
      %vm840 = vcmp.le.f32.partialorder %v839, 0.7853982
      %vm841 = vcmp.lt.s32.totalorder %v629, 0
      %v842 = vand.u32 %v629, 2139095040
      %v843 = vshrl.u32 %v842, 23
      %v844 = vsub.s32 %v843, 127
      %v845 = vand.u32 2147483647, %v629
      %v846 = vand.u32 %v845, 8388607
      %v847 = vor.u32 %v846, 8388608
      %v848 = vsub.s32 0, %v847
      %v849 = vadd.s32 %v844, 1
      %vm850 = vcmp.gt.s32.totalorder %v849, 0
      %v851 = vsel %vm850, %v849, 0
      %v852 = vshrl.u32 %v851, 5
      %v853 = vand.u32 %v851, 31
      %v854 = vsub.s32 32, %v853
      %v855 = vshrl.u32 683565275, %v854
      %v856 = vshll.u32 683565275, %v853
      %v857 = vshrl.u32 2475754826, %v854
      %v858 = vor.u32 %v856, %v857
      %v859 = vshll.u32 2475754826, %v853
      %v860 = vshrl.u32 2131351028, %v854
      %v861 = vor.u32 %v859, %v860
      %v862 = vshll.u32 2131351028, %v853
      %v863 = vshrl.u32 2102212464, %v854
      %v864 = vor.u32 %v862, %v863
      %v865 = vshll.u32 2102212464, %v853
      %v866 = vshrl.u32 920167782, %v854
      %v867 = vor.u32 %v865, %v866
      %v868 = vshll.u32 920167782, %v853
      %v869 = vshrl.u32 1326507024, %v854
      %v870 = vor.u32 %v868, %v869
      %vm871 = vcmp.lt.s32.totalorder %v852, 1
      %vm872 = vcmp.lt.s32.totalorder %v852, 2
      %vm873 = vcmp.lt.s32.totalorder %v852, 3
      %vm874 = vcmp.lt.s32.totalorder %v852, 4
      %v875 = vsel %vm871, %v855, %v858
      %v876 = vsel %vm874, %v864, 2102212464
      %v877 = vsel %vm873, %v861, %v876
      %v878 = vsel %vm872, %v875, %v877
      %v879 = vsel %vm871, %v858, %v861
      %v880 = vsel %vm874, %v867, 920167782
      %v881 = vsel %vm873, %v864, %v880
      %v882 = vsel %vm872, %v879, %v881
      %v883 = vsel %vm871, %v861, %v864
      %v884 = vsel %vm874, %v870, 1326507024
      %v885 = vsel %vm873, %v867, %v884
      %v886 = vsel %vm872, %v883, %v885
      %v887 = vshll.u32 %v847, 8
      %v888 = vmul.u32.u64.compose %v887, %v886
      %v889 = vextract.low.u32 %v888
      %v890 = vextract.high.u32 %v888
      %v891 = vmul.u32.u64.compose %v887, %v882
      %v892 = vextract.low.u32 %v891
      %v893 = vextract.high.u32 %v891
      %v894 = vmul.u32 %v887, %v878
      %v895 = vadd.s32 %v890, %v892
      %vm896 = vc.u32 %v890, %v892
      %v897 = vadd.s32 %v893, 1
      %v898 = vsel %vm896, %v897, %v893
      %v899 = vadd.s32 %v894, %v898
      %v900 = vadd.s32 %v899, 536870912
      %v901 = vshrl.u32 %v900, 30
      %v902 = vshll.u32 %v901, 30
      %v903 = vsub.s32 %v899, %v902
      %vm904 = vcmp.lt.s32.totalorder %v903, 0
      %v905 = vsub.s32 0, %v903
      %v906 = vsel %vm904, %v905, %v903
      %v907 = vclz %v906
      %v908 = vsub.s32 %v907, 2
      %vm909 = vcmp.gt.s32.totalorder 0, %v908
      %v910 = vsel %vm909, 0, %v908
      %v911 = vsub.s32 32, %v910
      %v912 = vshll.u32 %v903, %v910
      %v913 = vshrl.u32 %v895, %v911
      %v914 = vor.u32 %v912, %v913
      %v915 = vsub.s32 4294967266, %v910
      %v916 = vadd.s32 %v915, 127
      %v917 = vshll.u32 %v916, 23
      %v918 = vor.u32 4788187, %v917
      %v919 = vand.u32 2147483647, %v918
      %v921 = vcvt.s32.f32 %v914
      %v922 = vmul.f32 %v921, %v919
      %v923 = vxor.u32 %v922, 2147483648
      %v924 = vsel %vm841, %v923, %v922
      %v925 = vsub.s32 4, %v901
      %v926 = vsel %vm841, %v925, %v901
      %v927 = vsel %vm840, %v629, %v924
      %v928 = vsel %vm840, 0, %v926
      %v929 = vcosq.f32.pop %v927
      %v930 = vsinq.f32.pop %v927
      %vm931 = vweird.f32 %v629
      %v932 = vadd.s32 %v928, 3
      %v933 = vand.u32 %v932, 3
      %vm934 = vcmp.lt.s32.totalorder %v933, 2
      %vm935 = vcmp.eq.s32.totalorder %v933, 0
      %v936 = vxor.u32 %v930, 2147483648
      %v937 = vsel %vm935, %v929, %v936
      %vm938 = vcmp.eq.s32.totalorder %v933, 2
      %v939 = vxor.u32 %v929, 2147483648
      %v940 = vsel %vm938, %v939, %v930
      %v941 = vsel %vm934, %v937, %v940
      %v942 = vsel %vm931, nan, %v941
      %v943 = vand.u32 2147483647, %v630
      %vm944 = vcmp.le.f32.partialorder %v943, 0.7853982
      %vm945 = vcmp.lt.s32.totalorder %v630, 0
      %v946 = vand.u32 %v630, 2139095040
      %v947 = vshrl.u32 %v946, 23
      %v948 = vsub.s32 %v947, 127
      %v949 = vand.u32 2147483647, %v630
      %v950 = vand.u32 %v949, 8388607
      %v951 = vor.u32 %v950, 8388608
      %v952 = vsub.s32 0, %v951
      %v953 = vadd.s32 %v948, 1
      %vm954 = vcmp.gt.s32.totalorder %v953, 0
      %v955 = vsel %vm954, %v953, 0
      %v956 = vshrl.u32 %v955, 5
      %v957 = vand.u32 %v955, 31
      %v958 = vsub.s32 32, %v957
      %v959 = vshrl.u32 683565275, %v958
      %v960 = vshll.u32 683565275, %v957
      %v961 = vshrl.u32 2475754826, %v958
      %v962 = vor.u32 %v960, %v961
      %v963 = vshll.u32 2475754826, %v957
      %v964 = vshrl.u32 2131351028, %v958
      %v965 = vor.u32 %v963, %v964
      %v966 = vshll.u32 2131351028, %v957
      %v967 = vshrl.u32 2102212464, %v958
      %v968 = vor.u32 %v966, %v967
      %v969 = vshll.u32 2102212464, %v957
      %v970 = vshrl.u32 920167782, %v958
      %v971 = vor.u32 %v969, %v970
      %v972 = vshll.u32 920167782, %v957
      %v973 = vshrl.u32 1326507024, %v958
      %v974 = vor.u32 %v972, %v973
      %vm975 = vcmp.lt.s32.totalorder %v956, 1
      %vm976 = vcmp.lt.s32.totalorder %v956, 2
      %vm977 = vcmp.lt.s32.totalorder %v956, 3
      %vm978 = vcmp.lt.s32.totalorder %v956, 4
      %v979 = vsel %vm975, %v959, %v962
      %v980 = vsel %vm978, %v968, 2102212464
      %v981 = vsel %vm977, %v965, %v980
      %v982 = vsel %vm976, %v979, %v981
      %v983 = vsel %vm975, %v962, %v965
      %v984 = vsel %vm978, %v971, 920167782
      %v985 = vsel %vm977, %v968, %v984
      %v986 = vsel %vm976, %v983, %v985
      %v987 = vsel %vm975, %v965, %v968
      %v988 = vsel %vm978, %v974, 1326507024
      %v989 = vsel %vm977, %v971, %v988
      %v990 = vsel %vm976, %v987, %v989
      %v991 = vshll.u32 %v951, 8
      %v992 = vmul.u32.u64.compose %v991, %v990
      %v993 = vextract.low.u32 %v992
      %v994 = vextract.high.u32 %v992
      %v995 = vmul.u32.u64.compose %v991, %v986
      %v996 = vextract.low.u32 %v995
      %v997 = vextract.high.u32 %v995
      %v998 = vmul.u32 %v991, %v982
      %v999 = vadd.s32 %v994, %v996
      %vm1000 = vc.u32 %v994, %v996
      %v1001 = vadd.s32 %v997, 1
      %v1002 = vsel %vm1000, %v1001, %v997
      %v1003 = vadd.s32 %v998, %v1002
      %v1004 = vadd.s32 %v1003, 536870912
      %v1005 = vshrl.u32 %v1004, 30
      %v1006 = vshll.u32 %v1005, 30
      %v1007 = vsub.s32 %v1003, %v1006
      %vm1008 = vcmp.lt.s32.totalorder %v1007, 0
      %v1009 = vsub.s32 0, %v1007
      %v1010 = vsel %vm1008, %v1009, %v1007
      %v1011 = vclz %v1010
      %v1012 = vsub.s32 %v1011, 2
      %vm1013 = vcmp.gt.s32.totalorder 0, %v1012
      %v1014 = vsel %vm1013, 0, %v1012
      %v1015 = vsub.s32 32, %v1014
      %v1016 = vshll.u32 %v1007, %v1014
      %v1017 = vshrl.u32 %v999, %v1015
      %v1018 = vor.u32 %v1016, %v1017
      %v1019 = vsub.s32 4294967266, %v1014
      %v1020 = vadd.s32 %v1019, 127
      %v1021 = vshll.u32 %v1020, 23
      %v1022 = vor.u32 4788187, %v1021
      %v1023 = vand.u32 2147483647, %v1022
      %v1025 = vcvt.s32.f32 %v1018
      %v1026 = vmul.f32 %v1025, %v1023
      %v1027 = vxor.u32 %v1026, 2147483648
      %v1028 = vsel %vm945, %v1027, %v1026
      %v1029 = vsub.s32 4, %v1005
      %v1030 = vsel %vm945, %v1029, %v1005
      %v1031 = vsel %vm944, %v630, %v1028
      %v1032 = vsel %vm944, 0, %v1030
      %v1033 = vcosq.f32.pop %v1031
      %v1034 = vsinq.f32.pop %v1031
      %vm1035 = vweird.f32 %v630
      %v1036 = vadd.s32 %v1032, 3
      %v1037 = vand.u32 %v1036, 3
      %vm1038 = vcmp.lt.s32.totalorder %v1037, 2
      %vm1039 = vcmp.eq.s32.totalorder %v1037, 0
      %v1040 = vxor.u32 %v1034, 2147483648
      %v1041 = vsel %vm1039, %v1033, %v1040
      %vm1042 = vcmp.eq.s32.totalorder %v1037, 2
      %v1043 = vxor.u32 %v1033, 2147483648
      %v1044 = vsel %vm1042, %v1043, %v1034
      %v1045 = vsel %vm1038, %v1041, %v1044
      %v1046 = vsel %vm1035, nan, %v1045
      %v1047 = vld [vmem:[%s5] sm:$0xff]
      %v1048 = vld [vmem:[%s5 + $0x8] sm:$0xff]
      %v1049 = vld [vmem:[%s5 + $0x10] sm:$0xff]
      %v1050 = vld [vmem:[%s5 + $0x18] sm:$0xff]
      %v1051 = vld [vmem:[%s6] sm:$0xff]
      %v1052 = vld [vmem:[%s6 + $0x8] sm:$0xff]
      %v1053 = vld [vmem:[%s6 + $0x10] sm:$0xff]
      %v1054 = vld [vmem:[%s6 + $0x18] sm:$0xff]
      %1056 = vset.pattern.permute.xlu0 0
      %1057 = vperm.xlu0 %1056, %v1051
      %v1058 = vpop.permute.xlu0 %1057
      %1061 = vset.pattern.permute.xlu0 0
      %1062 = vperm.xlu0 %1061, %v1052
      %v1063 = vpop.permute.xlu0 %1062
      %1066 = vset.pattern.permute.xlu0 0
      %1067 = vperm.xlu0 %1066, %v1053
      %v1068 = vpop.permute.xlu0 %1067
      %1071 = vset.pattern.permute.xlu0 0
      %1072 = vperm.xlu0 %1071, %v1054
      %v1073 = vpop.permute.xlu0 %1072
      %vm1075 = vcmask 261120
      %v1077 = vsel %vm1075, %v1047, 0
      %v1080 = vsel %vm1075, %v1048, 0
      %v1083 = vsel %vm1075, %v1049, 0
      %v1086 = vsel %vm1075, %v1050, 0
      %1088 = vmatprep.subr.mxu0 0.0
      %1089 = vmatpush1.msra.mxu0 %v734
      %1090 = vmatprep.subr.mxu0 0.0
      %1091 = vmatpush1.msra.mxu0 %v838
      %1092 = vmatprep.subr.mxu0 0.0
      %1093 = vmatpush1.msra.mxu0 %v942
      %1094 = vmatprep.subr.mxu0 0.0
      %1095 = vmatpush1.msra.mxu0 %v1046
      %1096 = vmatprep.subr.mxu0 0.0
      %1097 = vmatpush1.msra.mxu0 0.0
      %1098 = vmatprep.subr.mxu0 0.0
      %1099 = vmatpush1.msra.mxu0 0.0
      %1100 = vmatprep.subr.mxu0 0.0
      %1101 = vmatpush1.msra.mxu0 0.0
      %1102 = vmatprep.subr.mxu0 0.0
      %1103 = vmatpush1.msra.mxu0 0.0
      %1104 = vmatprep.subr.mxu0 0.0
      %1105 = vmatpush1.msra.mxu0 0.0
      %1106 = vmatprep.subr.mxu0 0.0
      %1107 = vmatpush1.msra.mxu0 0.0
      %1108 = vmatprep.subr.mxu0 0.0
      %1109 = vmatpush1.msra.mxu0 0.0
      %1110 = vmatprep.subr.mxu0 0.0
      %1111 = vmatpush1.msra.mxu0 0.0
      %1112 = vmatprep.subr.mxu0 0.0
      %1113 = vmatpush1.msra.mxu0 0.0
      %1114 = vmatprep.subr.mxu0 0.0
      %1115 = vmatpush1.msra.mxu0 0.0
      %1116 = vmatprep.subr.mxu0 0.0
      %1117 = vmatpush1.msra.mxu0 0.0
      %1118 = vmatprep.subr.mxu0 0.0
      %1119 = vmatpush1.msra.mxu0 0.0
      %1120 = vmatprep.subr.mxu0 0.0
      %1121 = vmatpush1.msra.mxu0 0.0
      %1122 = vmatprep.subr.mxu0 0.0
      %1123 = vmatpush1.msra.mxu0 0.0
      %1124 = vmatprep.subr.mxu0 0.0
      %1125 = vmatpush1.msra.mxu0 0.0
      %1126 = vmatprep.subr.mxu0 0.0
      %1127 = vmatpush1.msra.mxu0 0.0
      %1128 = vmatprep.subr.mxu0 0.0
      %1129 = vmatpush1.msra.mxu0 0.0
      %1130 = vmatprep.subr.mxu0 0.0
      %1131 = vmatpush1.msra.mxu0 0.0
      %1132 = vmatprep.subr.mxu0 0.0
      %1133 = vmatpush1.msra.mxu0 0.0
      %1134 = vmatprep.subr.mxu0 0.0
      %1135 = vmatpush1.msra.mxu0 0.0
      %1136 = vmatprep.subr.mxu0 0.0
      %1137 = vmatpush1.msra.mxu0 0.0
      %1138 = vmatprep.subr.mxu0 0.0
      %1139 = vmatpush1.msra.mxu0 0.0
      %1140 = vmatprep.subr.mxu0 0.0
      %1141 = vmatpush1.msra.mxu0 0.0
      %1142 = vmatprep.subr.mxu0 0.0
      %1143 = vmatpush1.msra.mxu0 0.0
      %1144 = vmatprep.subr.mxu0 0.0
      %1145 = vmatpush1.msra.mxu0 0.0
      %1146 = vmatprep.subr.mxu0 0.0
      %1147 = vmatpush1.msra.mxu0 0.0
      %1148 = vmatprep.subr.mxu0 0.0
      %1149 = vmatpush1.msra.mxu0 0.0
      %1150 = vmatprep.subr.mxu0 0.0
      %1151 = vmatpush1.msra.mxu0 0.0
      %1152 = vmatprep.mubr.f32.mxu0 0.0
      %1153 = vmatmul.mubr.f32.gmra.mrb[0].mxu0 %v1077
      %v1154 = vpop.f32.mrb[0].mxu0
      %v1155 = vadd.f32 %v1058, %v1154
      %v1156 = vpop.f32.mrb[0].mxu0
      %1157 = vmatprep.mubr.f32.mxu0 0.0
      %1158 = vmatmul.mubr.f32.gmra.mrb[0].mxu0 %v1080
      %v1159 = vpop.f32.mrb[0].mxu0
      %v1160 = vadd.f32 %v1063, %v1159
      %v1161 = vpop.f32.mrb[0].mxu0
      %1162 = vmatprep.mubr.f32.mxu0 0.0
      %1163 = vmatmul.mubr.f32.gmra.mrb[0].mxu0 %v1083
      %v1164 = vpop.f32.mrb[0].mxu0
      %v1165 = vadd.f32 %v1068, %v1164
      %v1166 = vpop.f32.mrb[0].mxu0
      %1167 = vmatprep.mubr.f32.mxu0 0.0
      %1168 = vmatmul.mubr.f32.gmra.mrb[0].mxu0 %v1086
      %v1169 = vpop.f32.mrb[0].mxu0
      %v1170 = vadd.f32 %v1073, %v1169
      %v1171 = vpop.f32.mrb[0].mxu0
      %1172 = vdwg.mxu0
      %1174 = vset.pattern.permute.xlu0 0
      %1175 = vperm.xlu0 %1174, %v451
      %v1176 = vpop.permute.xlu0 %1175
      %1179 = vset.pattern.permute.xlu0 0
      %1180 = vperm.xlu0 %1179, %v452
      %v1181 = vpop.permute.xlu0 %1180
      %1184 = vset.pattern.permute.xlu0 0
      %1185 = vperm.xlu0 %1184, %v453
      %v1186 = vpop.permute.xlu0 %1185
      %1189 = vset.pattern.permute.xlu0 0
      %1190 = vperm.xlu0 %1189, %v454
      %v1191 = vpop.permute.xlu0 %1190
      %v1193 = vmul.f32 %v1176, %v1155
      %v1194 = vmul.f32 %v1181, %v1160
      %v1195 = vmul.f32 %v1186, %v1165
      %v1196 = vmul.f32 %v1191, %v1170
      %1198 = vset.pattern.permute.xlu0 0
      %1199 = vperm.xlu0 %1198, %v463
      %v1200 = vpop.permute.xlu0 %1199
      %1203 = vset.pattern.permute.xlu0 0
      %1204 = vperm.xlu0 %1203, %v464
      %v1205 = vpop.permute.xlu0 %1204
      %1208 = vset.pattern.permute.xlu0 0
      %1209 = vperm.xlu0 %1208, %v465
      %v1210 = vpop.permute.xlu0 %1209
      %1213 = vset.pattern.permute.xlu0 0
      %1214 = vperm.xlu0 %1213, %v466
      %v1215 = vpop.permute.xlu0 %1214
      %v1217 = vadd.f32 %v1193, %v1200
      %v1218 = vadd.f32 %v1194, %v1205
      %v1219 = vadd.f32 %v1195, %v1210
      %v1220 = vadd.f32 %v1196, %v1215
      %v1221 = vand.u32 2147483647, %v1217
      %vm1222 = vcmp.le.f32.partialorder %v1221, 0.7853982
      %vm1223 = vcmp.lt.s32.totalorder %v1217, 0
      %v1224 = vand.u32 %v1217, 2139095040
      %v1225 = vshrl.u32 %v1224, 23
      %v1226 = vsub.s32 %v1225, 127
      %v1227 = vand.u32 2147483647, %v1217
      %v1228 = vand.u32 %v1227, 8388607
      %v1229 = vor.u32 %v1228, 8388608
      %v1230 = vsub.s32 0, %v1229
      %v1231 = vadd.s32 %v1226, 1
      %vm1232 = vcmp.gt.s32.totalorder %v1231, 0
      %v1233 = vsel %vm1232, %v1231, 0
      %v1234 = vshrl.u32 %v1233, 5
      %v1235 = vand.u32 %v1233, 31
      %v1236 = vsub.s32 32, %v1235
      %v1237 = vshrl.u32 683565275, %v1236
      %v1238 = vshll.u32 683565275, %v1235
      %v1239 = vshrl.u32 2475754826, %v1236
      %v1240 = vor.u32 %v1238, %v1239
      %v1241 = vshll.u32 2475754826, %v1235
      %v1242 = vshrl.u32 2131351028, %v1236
      %v1243 = vor.u32 %v1241, %v1242
      %v1244 = vshll.u32 2131351028, %v1235
      %v1245 = vshrl.u32 2102212464, %v1236
      %v1246 = vor.u32 %v1244, %v1245
      %v1247 = vshll.u32 2102212464, %v1235
      %v1248 = vshrl.u32 920167782, %v1236
      %v1249 = vor.u32 %v1247, %v1248
      %v1250 = vshll.u32 920167782, %v1235
      %v1251 = vshrl.u32 1326507024, %v1236
      %v1252 = vor.u32 %v1250, %v1251
      %vm1253 = vcmp.lt.s32.totalorder %v1234, 1
      %vm1254 = vcmp.lt.s32.totalorder %v1234, 2
      %vm1255 = vcmp.lt.s32.totalorder %v1234, 3
      %vm1256 = vcmp.lt.s32.totalorder %v1234, 4
      %v1257 = vsel %vm1253, %v1237, %v1240
      %v1258 = vsel %vm1256, %v1246, 2102212464
      %v1259 = vsel %vm1255, %v1243, %v1258
      %v1260 = vsel %vm1254, %v1257, %v1259
      %v1261 = vsel %vm1253, %v1240, %v1243
      %v1262 = vsel %vm1256, %v1249, 920167782
      %v1263 = vsel %vm1255, %v1246, %v1262
      %v1264 = vsel %vm1254, %v1261, %v1263
      %v1265 = vsel %vm1253, %v1243, %v1246
      %v1266 = vsel %vm1256, %v1252, 1326507024
      %v1267 = vsel %vm1255, %v1249, %v1266
      %v1268 = vsel %vm1254, %v1265, %v1267
      %v1269 = vshll.u32 %v1229, 8
      %v1270 = vmul.u32.u64.compose %v1269, %v1268
      %v1271 = vextract.low.u32 %v1270
      %v1272 = vextract.high.u32 %v1270
      %v1273 = vmul.u32.u64.compose %v1269, %v1264
      %v1274 = vextract.low.u32 %v1273
      %v1275 = vextract.high.u32 %v1273
      %v1276 = vmul.u32 %v1269, %v1260
      %v1277 = vadd.s32 %v1272, %v1274
      %vm1278 = vc.u32 %v1272, %v1274
      %v1279 = vadd.s32 %v1275, 1
      %v1280 = vsel %vm1278, %v1279, %v1275
      %v1281 = vadd.s32 %v1276, %v1280
      %v1282 = vadd.s32 %v1281, 536870912
      %v1283 = vshrl.u32 %v1282, 30
      %v1284 = vshll.u32 %v1283, 30
      %v1285 = vsub.s32 %v1281, %v1284
      %vm1286 = vcmp.lt.s32.totalorder %v1285, 0
      %v1287 = vsub.s32 0, %v1285
      %v1288 = vsel %vm1286, %v1287, %v1285
      %v1289 = vclz %v1288
      %v1290 = vsub.s32 %v1289, 2
      %vm1291 = vcmp.gt.s32.totalorder 0, %v1290
      %v1292 = vsel %vm1291, 0, %v1290
      %v1293 = vsub.s32 32, %v1292
      %v1294 = vshll.u32 %v1285, %v1292
      %v1295 = vshrl.u32 %v1277, %v1293
      %v1296 = vor.u32 %v1294, %v1295
      %v1297 = vsub.s32 4294967266, %v1292
      %v1298 = vadd.s32 %v1297, 127
      %v1299 = vshll.u32 %v1298, 23
      %v1300 = vor.u32 4788187, %v1299
      %v1301 = vand.u32 2147483647, %v1300
      %v1303 = vcvt.s32.f32 %v1296
      %v1304 = vmul.f32 %v1303, %v1301
      %v1305 = vxor.u32 %v1304, 2147483648
      %v1306 = vsel %vm1223, %v1305, %v1304
      %v1307 = vsub.s32 4, %v1283
      %v1308 = vsel %vm1223, %v1307, %v1283
      %v1309 = vsel %vm1222, %v1217, %v1306
      %v1310 = vsel %vm1222, 0, %v1308
      %v1311 = vcosq.f32.pop %v1309
      %v1312 = vsinq.f32.pop %v1309
      %vm1313 = vweird.f32 %v1217
      %v1314 = vadd.s32 %v1310, 3
      %v1315 = vand.u32 %v1314, 3
      %vm1316 = vcmp.lt.s32.totalorder %v1315, 2
      %vm1317 = vcmp.eq.s32.totalorder %v1315, 0
      %v1318 = vxor.u32 %v1312, 2147483648
      %v1319 = vsel %vm1317, %v1311, %v1318
      %vm1320 = vcmp.eq.s32.totalorder %v1315, 2
      %v1321 = vxor.u32 %v1311, 2147483648
      %v1322 = vsel %vm1320, %v1321, %v1312
      %v1323 = vsel %vm1316, %v1319, %v1322
      %v1324 = vsel %vm1313, nan, %v1323
      %v1325 = vand.u32 2147483647, %v1218
      %vm1326 = vcmp.le.f32.partialorder %v1325, 0.7853982
      %vm1327 = vcmp.lt.s32.totalorder %v1218, 0
      %v1328 = vand.u32 %v1218, 2139095040
      %v1329 = vshrl.u32 %v1328, 23
      %v1330 = vsub.s32 %v1329, 127
      %v1331 = vand.u32 2147483647, %v1218
      %v1332 = vand.u32 %v1331, 8388607
      %v1333 = vor.u32 %v1332, 8388608
      %v1334 = vsub.s32 0, %v1333
      %v1335 = vadd.s32 %v1330, 1
      %vm1336 = vcmp.gt.s32.totalorder %v1335, 0
      %v1337 = vsel %vm1336, %v1335, 0
      %v1338 = vshrl.u32 %v1337, 5
      %v1339 = vand.u32 %v1337, 31
      %v1340 = vsub.s32 32, %v1339
      %v1341 = vshrl.u32 683565275, %v1340
      %v1342 = vshll.u32 683565275, %v1339
      %v1343 = vshrl.u32 2475754826, %v1340
      %v1344 = vor.u32 %v1342, %v1343
      %v1345 = vshll.u32 2475754826, %v1339
      %v1346 = vshrl.u32 2131351028, %v1340
      %v1347 = vor.u32 %v1345, %v1346
      %v1348 = vshll.u32 2131351028, %v1339
      %v1349 = vshrl.u32 2102212464, %v1340
      %v1350 = vor.u32 %v1348, %v1349
      %v1351 = vshll.u32 2102212464, %v1339
      %v1352 = vshrl.u32 920167782, %v1340
      %v1353 = vor.u32 %v1351, %v1352
      %v1354 = vshll.u32 920167782, %v1339
      %v1355 = vshrl.u32 1326507024, %v1340
      %v1356 = vor.u32 %v1354, %v1355
      %vm1357 = vcmp.lt.s32.totalorder %v1338, 1
      %vm1358 = vcmp.lt.s32.totalorder %v1338, 2
      %vm1359 = vcmp.lt.s32.totalorder %v1338, 3
      %vm1360 = vcmp.lt.s32.totalorder %v1338, 4
      %v1361 = vsel %vm1357, %v1341, %v1344
      %v1362 = vsel %vm1360, %v1350, 2102212464
      %v1363 = vsel %vm1359, %v1347, %v1362
      %v1364 = vsel %vm1358, %v1361, %v1363
      %v1365 = vsel %vm1357, %v1344, %v1347
      %v1366 = vsel %vm1360, %v1353, 920167782
      %v1367 = vsel %vm1359, %v1350, %v1366
      %v1368 = vsel %vm1358, %v1365, %v1367
      %v1369 = vsel %vm1357, %v1347, %v1350
      %v1370 = vsel %vm1360, %v1356, 1326507024
      %v1371 = vsel %vm1359, %v1353, %v1370
      %v1372 = vsel %vm1358, %v1369, %v1371
      %v1373 = vshll.u32 %v1333, 8
      %v1374 = vmul.u32.u64.compose %v1373, %v1372
      %v1375 = vextract.low.u32 %v1374
      %v1376 = vextract.high.u32 %v1374
      %v1377 = vmul.u32.u64.compose %v1373, %v1368
      %v1378 = vextract.low.u32 %v1377
      %v1379 = vextract.high.u32 %v1377
      %v1380 = vmul.u32 %v1373, %v1364
      %v1381 = vadd.s32 %v1376, %v1378
      %vm1382 = vc.u32 %v1376, %v1378
      %v1383 = vadd.s32 %v1379, 1
      %v1384 = vsel %vm1382, %v1383, %v1379
      %v1385 = vadd.s32 %v1380, %v1384
      %v1386 = vadd.s32 %v1385, 536870912
      %v1387 = vshrl.u32 %v1386, 30
      %v1388 = vshll.u32 %v1387, 30
      %v1389 = vsub.s32 %v1385, %v1388
      %vm1390 = vcmp.lt.s32.totalorder %v1389, 0
      %v1391 = vsub.s32 0, %v1389
      %v1392 = vsel %vm1390, %v1391, %v1389
      %v1393 = vclz %v1392
      %v1394 = vsub.s32 %v1393, 2
      %vm1395 = vcmp.gt.s32.totalorder 0, %v1394
      %v1396 = vsel %vm1395, 0, %v1394
      %v1397 = vsub.s32 32, %v1396
      %v1398 = vshll.u32 %v1389, %v1396
      %v1399 = vshrl.u32 %v1381, %v1397
      %v1400 = vor.u32 %v1398, %v1399
      %v1401 = vsub.s32 4294967266, %v1396
      %v1402 = vadd.s32 %v1401, 127
      %v1403 = vshll.u32 %v1402, 23
      %v1404 = vor.u32 4788187, %v1403
      %v1405 = vand.u32 2147483647, %v1404
      %v1407 = vcvt.s32.f32 %v1400
      %v1408 = vmul.f32 %v1407, %v1405
      %v1409 = vxor.u32 %v1408, 2147483648
      %v1410 = vsel %vm1327, %v1409, %v1408
      %v1411 = vsub.s32 4, %v1387
      %v1412 = vsel %vm1327, %v1411, %v1387
      %v1413 = vsel %vm1326, %v1218, %v1410
      %v1414 = vsel %vm1326, 0, %v1412
      %v1415 = vcosq.f32.pop %v1413
      %v1416 = vsinq.f32.pop %v1413
      %vm1417 = vweird.f32 %v1218
      %v1418 = vadd.s32 %v1414, 3
      %v1419 = vand.u32 %v1418, 3
      %vm1420 = vcmp.lt.s32.totalorder %v1419, 2
      %vm1421 = vcmp.eq.s32.totalorder %v1419, 0
      %v1422 = vxor.u32 %v1416, 2147483648
      %v1423 = vsel %vm1421, %v1415, %v1422
      %vm1424 = vcmp.eq.s32.totalorder %v1419, 2
      %v1425 = vxor.u32 %v1415, 2147483648
      %v1426 = vsel %vm1424, %v1425, %v1416
      %v1427 = vsel %vm1420, %v1423, %v1426
      %v1428 = vsel %vm1417, nan, %v1427
      %v1429 = vand.u32 2147483647, %v1219
      %vm1430 = vcmp.le.f32.partialorder %v1429, 0.7853982
      %vm1431 = vcmp.lt.s32.totalorder %v1219, 0
      %v1432 = vand.u32 %v1219, 2139095040
      %v1433 = vshrl.u32 %v1432, 23
      %v1434 = vsub.s32 %v1433, 127
      %v1435 = vand.u32 2147483647, %v1219
      %v1436 = vand.u32 %v1435, 8388607
      %v1437 = vor.u32 %v1436, 8388608
      %v1438 = vsub.s32 0, %v1437
      %v1439 = vadd.s32 %v1434, 1
      %vm1440 = vcmp.gt.s32.totalorder %v1439, 0
      %v1441 = vsel %vm1440, %v1439, 0
      %v1442 = vshrl.u32 %v1441, 5
      %v1443 = vand.u32 %v1441, 31
      %v1444 = vsub.s32 32, %v1443
      %v1445 = vshrl.u32 683565275, %v1444
      %v1446 = vshll.u32 683565275, %v1443
      %v1447 = vshrl.u32 2475754826, %v1444
      %v1448 = vor.u32 %v1446, %v1447
      %v1449 = vshll.u32 2475754826, %v1443
      %v1450 = vshrl.u32 2131351028, %v1444
      %v1451 = vor.u32 %v1449, %v1450
      %v1452 = vshll.u32 2131351028, %v1443
      %v1453 = vshrl.u32 2102212464, %v1444
      %v1454 = vor.u32 %v1452, %v1453
      %v1455 = vshll.u32 2102212464, %v1443
      %v1456 = vshrl.u32 920167782, %v1444
      %v1457 = vor.u32 %v1455, %v1456
      %v1458 = vshll.u32 920167782, %v1443
      %v1459 = vshrl.u32 1326507024, %v1444
      %v1460 = vor.u32 %v1458, %v1459
      %vm1461 = vcmp.lt.s32.totalorder %v1442, 1
      %vm1462 = vcmp.lt.s32.totalorder %v1442, 2
      %vm1463 = vcmp.lt.s32.totalorder %v1442, 3
      %vm1464 = vcmp.lt.s32.totalorder %v1442, 4
      %v1465 = vsel %vm1461, %v1445, %v1448
      %v1466 = vsel %vm1464, %v1454, 2102212464
      %v1467 = vsel %vm1463, %v1451, %v1466
      %v1468 = vsel %vm1462, %v1465, %v1467
      %v1469 = vsel %vm1461, %v1448, %v1451
      %v1470 = vsel %vm1464, %v1457, 920167782
      %v1471 = vsel %vm1463, %v1454, %v1470
      %v1472 = vsel %vm1462, %v1469, %v1471
      %v1473 = vsel %vm1461, %v1451, %v1454
      %v1474 = vsel %vm1464, %v1460, 1326507024
      %v1475 = vsel %vm1463, %v1457, %v1474
      %v1476 = vsel %vm1462, %v1473, %v1475
      %v1477 = vshll.u32 %v1437, 8
      %v1478 = vmul.u32.u64.compose %v1477, %v1476
      %v1479 = vextract.low.u32 %v1478
      %v1480 = vextract.high.u32 %v1478
      %v1481 = vmul.u32.u64.compose %v1477, %v1472
      %v1482 = vextract.low.u32 %v1481
      %v1483 = vextract.high.u32 %v1481
      %v1484 = vmul.u32 %v1477, %v1468
      %v1485 = vadd.s32 %v1480, %v1482
      %vm1486 = vc.u32 %v1480, %v1482
      %v1487 = vadd.s32 %v1483, 1
      %v1488 = vsel %vm1486, %v1487, %v1483
      %v1489 = vadd.s32 %v1484, %v1488
      %v1490 = vadd.s32 %v1489, 536870912
      %v1491 = vshrl.u32 %v1490, 30
      %v1492 = vshll.u32 %v1491, 30
      %v1493 = vsub.s32 %v1489, %v1492
      %vm1494 = vcmp.lt.s32.totalorder %v1493, 0
      %v1495 = vsub.s32 0, %v1493
      %v1496 = vsel %vm1494, %v1495, %v1493
      %v1497 = vclz %v1496
      %v1498 = vsub.s32 %v1497, 2
      %vm1499 = vcmp.gt.s32.totalorder 0, %v1498
      %v1500 = vsel %vm1499, 0, %v1498
      %v1501 = vsub.s32 32, %v1500
      %v1502 = vshll.u32 %v1493, %v1500
      %v1503 = vshrl.u32 %v1485, %v1501
      %v1504 = vor.u32 %v1502, %v1503
      %v1505 = vsub.s32 4294967266, %v1500
      %v1506 = vadd.s32 %v1505, 127
      %v1507 = vshll.u32 %v1506, 23
      %v1508 = vor.u32 4788187, %v1507
      %v1509 = vand.u32 2147483647, %v1508
      %v1511 = vcvt.s32.f32 %v1504
      %v1512 = vmul.f32 %v1511, %v1509
      %v1513 = vxor.u32 %v1512, 2147483648
      %v1514 = vsel %vm1431, %v1513, %v1512
      %v1515 = vsub.s32 4, %v1491
      %v1516 = vsel %vm1431, %v1515, %v1491
      %v1517 = vsel %vm1430, %v1219, %v1514
      %v1518 = vsel %vm1430, 0, %v1516
      %v1519 = vcosq.f32.pop %v1517
      %v1520 = vsinq.f32.pop %v1517
      %vm1521 = vweird.f32 %v1219
      %v1522 = vadd.s32 %v1518, 3
      %v1523 = vand.u32 %v1522, 3
      %vm1524 = vcmp.lt.s32.totalorder %v1523, 2
      %vm1525 = vcmp.eq.s32.totalorder %v1523, 0
      %v1526 = vxor.u32 %v1520, 2147483648
      %v1527 = vsel %vm1525, %v1519, %v1526
      %vm1528 = vcmp.eq.s32.totalorder %v1523, 2
      %v1529 = vxor.u32 %v1519, 2147483648
      %v1530 = vsel %vm1528, %v1529, %v1520
      %v1531 = vsel %vm1524, %v1527, %v1530
      %v1532 = vsel %vm1521, nan, %v1531
      %v1533 = vand.u32 2147483647, %v1220
      %vm1534 = vcmp.le.f32.partialorder %v1533, 0.7853982
      %vm1535 = vcmp.lt.s32.totalorder %v1220, 0
      %v1536 = vand.u32 %v1220, 2139095040
      %v1537 = vshrl.u32 %v1536, 23
      %v1538 = vsub.s32 %v1537, 127
      %v1539 = vand.u32 2147483647, %v1220
      %v1540 = vand.u32 %v1539, 8388607
      %v1541 = vor.u32 %v1540, 8388608
      %v1542 = vsub.s32 0, %v1541
      %v1543 = vadd.s32 %v1538, 1
      %vm1544 = vcmp.gt.s32.totalorder %v1543, 0
      %v1545 = vsel %vm1544, %v1543, 0
      %v1546 = vshrl.u32 %v1545, 5
      %v1547 = vand.u32 %v1545, 31
      %v1548 = vsub.s32 32, %v1547
      %v1549 = vshrl.u32 683565275, %v1548
      %v1550 = vshll.u32 683565275, %v1547
      %v1551 = vshrl.u32 2475754826, %v1548
      %v1552 = vor.u32 %v1550, %v1551
      %v1553 = vshll.u32 2475754826, %v1547
      %v1554 = vshrl.u32 2131351028, %v1548
      %v1555 = vor.u32 %v1553, %v1554
      %v1556 = vshll.u32 2131351028, %v1547
      %v1557 = vshrl.u32 2102212464, %v1548
      %v1558 = vor.u32 %v1556, %v1557
      %v1559 = vshll.u32 2102212464, %v1547
      %v1560 = vshrl.u32 920167782, %v1548
      %v1561 = vor.u32 %v1559, %v1560
      %v1562 = vshll.u32 920167782, %v1547
      %v1563 = vshrl.u32 1326507024, %v1548
      %v1564 = vor.u32 %v1562, %v1563
      %vm1565 = vcmp.lt.s32.totalorder %v1546, 1
      %vm1566 = vcmp.lt.s32.totalorder %v1546, 2
      %vm1567 = vcmp.lt.s32.totalorder %v1546, 3
      %vm1568 = vcmp.lt.s32.totalorder %v1546, 4
      %v1569 = vsel %vm1565, %v1549, %v1552
      %v1570 = vsel %vm1568, %v1558, 2102212464
      %v1571 = vsel %vm1567, %v1555, %v1570
      %v1572 = vsel %vm1566, %v1569, %v1571
      %v1573 = vsel %vm1565, %v1552, %v1555
      %v1574 = vsel %vm1568, %v1561, 920167782
      %v1575 = vsel %vm1567, %v1558, %v1574
      %v1576 = vsel %vm1566, %v1573, %v1575
      %v1577 = vsel %vm1565, %v1555, %v1558
      %v1578 = vsel %vm1568, %v1564, 1326507024
      %v1579 = vsel %vm1567, %v1561, %v1578
      %v1580 = vsel %vm1566, %v1577, %v1579
      %v1581 = vshll.u32 %v1541, 8
      %v1582 = vmul.u32.u64.compose %v1581, %v1580
      %v1583 = vextract.low.u32 %v1582
      %v1584 = vextract.high.u32 %v1582
      %v1585 = vmul.u32.u64.compose %v1581, %v1576
      %v1586 = vextract.low.u32 %v1585
      %v1587 = vextract.high.u32 %v1585
      %v1588 = vmul.u32 %v1581, %v1572
      %v1589 = vadd.s32 %v1584, %v1586
      %vm1590 = vc.u32 %v1584, %v1586
      %v1591 = vadd.s32 %v1587, 1
      %v1592 = vsel %vm1590, %v1591, %v1587
      %v1593 = vadd.s32 %v1588, %v1592
      %v1594 = vadd.s32 %v1593, 536870912
      %v1595 = vshrl.u32 %v1594, 30
      %v1596 = vshll.u32 %v1595, 30
      %v1597 = vsub.s32 %v1593, %v1596
      %vm1598 = vcmp.lt.s32.totalorder %v1597, 0
      %v1599 = vsub.s32 0, %v1597
      %v1600 = vsel %vm1598, %v1599, %v1597
      %v1601 = vclz %v1600
      %v1602 = vsub.s32 %v1601, 2
      %vm1603 = vcmp.gt.s32.totalorder 0, %v1602
      %v1604 = vsel %vm1603, 0, %v1602
      %v1605 = vsub.s32 32, %v1604
      %v1606 = vshll.u32 %v1597, %v1604
      %v1607 = vshrl.u32 %v1589, %v1605
      %v1608 = vor.u32 %v1606, %v1607
      %v1609 = vsub.s32 4294967266, %v1604
      %v1610 = vadd.s32 %v1609, 127
      %v1611 = vshll.u32 %v1610, 23
      %v1612 = vor.u32 4788187, %v1611
      %v1613 = vand.u32 2147483647, %v1612
      %v1615 = vcvt.s32.f32 %v1608
      %v1616 = vmul.f32 %v1615, %v1613
      %v1617 = vxor.u32 %v1616, 2147483648
      %v1618 = vsel %vm1535, %v1617, %v1616
      %v1619 = vsub.s32 4, %v1595
      %v1620 = vsel %vm1535, %v1619, %v1595
      %v1621 = vsel %vm1534, %v1220, %v1618
      %v1622 = vsel %vm1534, 0, %v1620
      %v1623 = vcosq.f32.pop %v1621
      %v1624 = vsinq.f32.pop %v1621
      %vm1625 = vweird.f32 %v1220
      %v1626 = vadd.s32 %v1622, 3
      %v1627 = vand.u32 %v1626, 3
      %vm1628 = vcmp.lt.s32.totalorder %v1627, 2
      %vm1629 = vcmp.eq.s32.totalorder %v1627, 0
      %v1630 = vxor.u32 %v1624, 2147483648
      %v1631 = vsel %vm1629, %v1623, %v1630
      %vm1632 = vcmp.eq.s32.totalorder %v1627, 2
      %v1633 = vxor.u32 %v1623, 2147483648
      %v1634 = vsel %vm1632, %v1633, %v1624
      %v1635 = vsel %vm1628, %v1631, %v1634
      %v1636 = vsel %vm1625, nan, %v1635
      %v1637 = vld [vmem:[%s7] sm:$0xff]
      %v1638 = vld [vmem:[%s7 + $0x8] sm:$0xff]
      %v1639 = vld [vmem:[%s7 + $0x10] sm:$0xff]
      %v1640 = vld [vmem:[%s7 + $0x18] sm:$0xff]
      %v1641 = vld [vmem:[%s8] sm:$0xff]
      %v1642 = vld [vmem:[%s8 + $0x8] sm:$0xff]
      %v1643 = vld [vmem:[%s8 + $0x10] sm:$0xff]
      %v1644 = vld [vmem:[%s8 + $0x18] sm:$0xff]
      %1646 = vset.pattern.permute.xlu0 0
      %1647 = vperm.xlu0 %1646, %v1641
      %v1648 = vpop.permute.xlu0 %1647
      %1651 = vset.pattern.permute.xlu0 0
      %1652 = vperm.xlu0 %1651, %v1642
      %v1653 = vpop.permute.xlu0 %1652
      %1656 = vset.pattern.permute.xlu0 0
      %1657 = vperm.xlu0 %1656, %v1643
      %v1658 = vpop.permute.xlu0 %1657
      %1661 = vset.pattern.permute.xlu0 0
      %1662 = vperm.xlu0 %1661, %v1644
      %v1663 = vpop.permute.xlu0 %1662
      %v1666 = vsel %vm1075, %v1637, 0
      %v1669 = vsel %vm1075, %v1638, 0
      %v1672 = vsel %vm1075, %v1639, 0
      %v1675 = vsel %vm1075, %v1640, 0
      %1677 = vmatprep.subr.mxu0 0.0
      %1678 = vmatpush1.msra.mxu0 %v1324
      %1679 = vmatprep.subr.mxu0 0.0
      %1680 = vmatpush1.msra.mxu0 %v1428
      %1681 = vmatprep.subr.mxu0 0.0
      %1682 = vmatpush1.msra.mxu0 %v1532
      %1683 = vmatprep.subr.mxu0 0.0
      %1684 = vmatpush1.msra.mxu0 %v1636
      %1685 = vmatprep.subr.mxu0 0.0
      %1686 = vmatpush1.msra.mxu0 0.0
      %1687 = vmatprep.subr.mxu0 0.0
      %1688 = vmatpush1.msra.mxu0 0.0
      %1689 = vmatprep.subr.mxu0 0.0
      %1690 = vmatpush1.msra.mxu0 0.0
      %1691 = vmatprep.subr.mxu0 0.0
      %1692 = vmatpush1.msra.mxu0 0.0
      %1693 = vmatprep.subr.mxu0 0.0
      %1694 = vmatpush1.msra.mxu0 0.0
      %1695 = vmatprep.subr.mxu0 0.0
      %1696 = vmatpush1.msra.mxu0 0.0
      %1697 = vmatprep.subr.mxu0 0.0
      %1698 = vmatpush1.msra.mxu0 0.0
      %1699 = vmatprep.subr.mxu0 0.0
      %1700 = vmatpush1.msra.mxu0 0.0
      %1701 = vmatprep.subr.mxu0 0.0
      %1702 = vmatpush1.msra.mxu0 0.0
      %1703 = vmatprep.subr.mxu0 0.0
      %1704 = vmatpush1.msra.mxu0 0.0
      %1705 = vmatprep.subr.mxu0 0.0
      %1706 = vmatpush1.msra.mxu0 0.0
      %1707 = vmatprep.subr.mxu0 0.0
      %1708 = vmatpush1.msra.mxu0 0.0
      %1709 = vmatprep.subr.mxu0 0.0
      %1710 = vmatpush1.msra.mxu0 0.0
      %1711 = vmatprep.subr.mxu0 0.0
      %1712 = vmatpush1.msra.mxu0 0.0
      %1713 = vmatprep.subr.mxu0 0.0
      %1714 = vmatpush1.msra.mxu0 0.0
      %1715 = vmatprep.subr.mxu0 0.0
      %1716 = vmatpush1.msra.mxu0 0.0
      %1717 = vmatprep.subr.mxu0 0.0
      %1718 = vmatpush1.msra.mxu0 0.0
      %1719 = vmatprep.subr.mxu0 0.0
      %1720 = vmatpush1.msra.mxu0 0.0
      %1721 = vmatprep.subr.mxu0 0.0
      %1722 = vmatpush1.msra.mxu0 0.0
      %1723 = vmatprep.subr.mxu0 0.0
      %1724 = vmatpush1.msra.mxu0 0.0
      %1725 = vmatprep.subr.mxu0 0.0
      %1726 = vmatpush1.msra.mxu0 0.0
      %1727 = vmatprep.subr.mxu0 0.0
      %1728 = vmatpush1.msra.mxu0 0.0
      %1729 = vmatprep.subr.mxu0 0.0
      %1730 = vmatpush1.msra.mxu0 0.0
      %1731 = vmatprep.subr.mxu0 0.0
      %1732 = vmatpush1.msra.mxu0 0.0
      %1733 = vmatprep.subr.mxu0 0.0
      %1734 = vmatpush1.msra.mxu0 0.0
      %1735 = vmatprep.subr.mxu0 0.0
      %1736 = vmatpush1.msra.mxu0 0.0
      %1737 = vmatprep.subr.mxu0 0.0
      %1738 = vmatpush1.msra.mxu0 0.0
      %1739 = vmatprep.subr.mxu0 0.0
      %1740 = vmatpush1.msra.mxu0 0.0
      %1741 = vmatprep.mubr.f32.mxu0 0.0
      %1742 = vmatmul.mubr.f32.gmra.mrb[0].mxu0 %v1666
      %v1743 = vpop.f32.mrb[0].mxu0
      %v1744 = vadd.f32 %v1648, %v1743
      %v1745 = vpop.f32.mrb[0].mxu0
      %1746 = vmatprep.mubr.f32.mxu0 0.0
      %1747 = vmatmul.mubr.f32.gmra.mrb[0].mxu0 %v1669
      %v1748 = vpop.f32.mrb[0].mxu0
      %v1749 = vadd.f32 %v1653, %v1748
      %v1750 = vpop.f32.mrb[0].mxu0
      %1751 = vmatprep.mubr.f32.mxu0 0.0
      %1752 = vmatmul.mubr.f32.gmra.mrb[0].mxu0 %v1672
      %v1753 = vpop.f32.mrb[0].mxu0
      %v1754 = vadd.f32 %v1658, %v1753
      %v1755 = vpop.f32.mrb[0].mxu0
      %1756 = vmatprep.mubr.f32.mxu0 0.0
      %1757 = vmatmul.mubr.f32.gmra.mrb[0].mxu0 %v1675
      %v1758 = vpop.f32.mrb[0].mxu0
      %v1759 = vadd.f32 %v1663, %v1758
      %v1760 = vpop.f32.mrb[0].mxu0
      %1761 = vdwg.mxu0
      %1763 = vset.pattern.permute.xlu0 0
      %1764 = vperm.xlu0 %1763, %v455
      %v1765 = vpop.permute.xlu0 %1764
      %1768 = vset.pattern.permute.xlu0 0
      %1769 = vperm.xlu0 %1768, %v456
      %v1770 = vpop.permute.xlu0 %1769
      %1773 = vset.pattern.permute.xlu0 0
      %1774 = vperm.xlu0 %1773, %v457
      %v1775 = vpop.permute.xlu0 %1774
      %1778 = vset.pattern.permute.xlu0 0
      %1779 = vperm.xlu0 %1778, %v458
      %v1780 = vpop.permute.xlu0 %1779
      %v1782 = vmul.f32 %v1765, %v1744
      %v1783 = vmul.f32 %v1770, %v1749
      %v1784 = vmul.f32 %v1775, %v1754
      %v1785 = vmul.f32 %v1780, %v1759
      %1787 = vset.pattern.permute.xlu0 0
      %1788 = vperm.xlu0 %1787, %v467
      %v1789 = vpop.permute.xlu0 %1788
      %1792 = vset.pattern.permute.xlu0 0
      %1793 = vperm.xlu0 %1792, %v468
      %v1794 = vpop.permute.xlu0 %1793
      %1797 = vset.pattern.permute.xlu0 0
      %1798 = vperm.xlu0 %1797, %v469
      %v1799 = vpop.permute.xlu0 %1798
      %1802 = vset.pattern.permute.xlu0 0
      %1803 = vperm.xlu0 %1802, %v470
      %v1804 = vpop.permute.xlu0 %1803
      %v1806 = vadd.f32 %v1782, %v1789
      %v1807 = vadd.f32 %v1783, %v1794
      %v1808 = vadd.f32 %v1784, %v1799
      %v1809 = vadd.f32 %v1785, %v1804
      %v1810 = vand.u32 2147483647, %v1806
      %vm1811 = vcmp.le.f32.partialorder %v1810, 0.7853982
      %vm1812 = vcmp.lt.s32.totalorder %v1806, 0
      %v1813 = vand.u32 %v1806, 2139095040
      %v1814 = vshrl.u32 %v1813, 23
      %v1815 = vsub.s32 %v1814, 127
      %v1816 = vand.u32 2147483647, %v1806
      %v1817 = vand.u32 %v1816, 8388607
      %v1818 = vor.u32 %v1817, 8388608
      %v1819 = vsub.s32 0, %v1818
      %v1820 = vadd.s32 %v1815, 1
      %vm1821 = vcmp.gt.s32.totalorder %v1820, 0
      %v1822 = vsel %vm1821, %v1820, 0
      %v1823 = vshrl.u32 %v1822, 5
      %v1824 = vand.u32 %v1822, 31
      %v1825 = vsub.s32 32, %v1824
      %v1826 = vshrl.u32 683565275, %v1825
      %v1827 = vshll.u32 683565275, %v1824
      %v1828 = vshrl.u32 2475754826, %v1825
      %v1829 = vor.u32 %v1827, %v1828
      %v1830 = vshll.u32 2475754826, %v1824
      %v1831 = vshrl.u32 2131351028, %v1825
      %v1832 = vor.u32 %v1830, %v1831
      %v1833 = vshll.u32 2131351028, %v1824
      %v1834 = vshrl.u32 2102212464, %v1825
      %v1835 = vor.u32 %v1833, %v1834
      %v1836 = vshll.u32 2102212464, %v1824
      %v1837 = vshrl.u32 920167782, %v1825
      %v1838 = vor.u32 %v1836, %v1837
      %v1839 = vshll.u32 920167782, %v1824
      %v1840 = vshrl.u32 1326507024, %v1825
      %v1841 = vor.u32 %v1839, %v1840
      %vm1842 = vcmp.lt.s32.totalorder %v1823, 1
      %vm1843 = vcmp.lt.s32.totalorder %v1823, 2
      %vm1844 = vcmp.lt.s32.totalorder %v1823, 3
      %vm1845 = vcmp.lt.s32.totalorder %v1823, 4
      %v1846 = vsel %vm1842, %v1826, %v1829
      %v1847 = vsel %vm1845, %v1835, 2102212464
      %v1848 = vsel %vm1844, %v1832, %v1847
      %v1849 = vsel %vm1843, %v1846, %v1848
      %v1850 = vsel %vm1842, %v1829, %v1832
      %v1851 = vsel %vm1845, %v1838, 920167782
      %v1852 = vsel %vm1844, %v1835, %v1851
      %v1853 = vsel %vm1843, %v1850, %v1852
      %v1854 = vsel %vm1842, %v1832, %v1835
      %v1855 = vsel %vm1845, %v1841, 1326507024
      %v1856 = vsel %vm1844, %v1838, %v1855
      %v1857 = vsel %vm1843, %v1854, %v1856
      %v1858 = vshll.u32 %v1818, 8
      %v1859 = vmul.u32.u64.compose %v1858, %v1857
      %v1860 = vextract.low.u32 %v1859
      %v1861 = vextract.high.u32 %v1859
      %v1862 = vmul.u32.u64.compose %v1858, %v1853
      %v1863 = vextract.low.u32 %v1862
      %v1864 = vextract.high.u32 %v1862
      %v1865 = vmul.u32 %v1858, %v1849
      %v1866 = vadd.s32 %v1861, %v1863
      %vm1867 = vc.u32 %v1861, %v1863
      %v1868 = vadd.s32 %v1864, 1
      %v1869 = vsel %vm1867, %v1868, %v1864
      %v1870 = vadd.s32 %v1865, %v1869
      %v1871 = vadd.s32 %v1870, 536870912
      %v1872 = vshrl.u32 %v1871, 30
      %v1873 = vshll.u32 %v1872, 30
      %v1874 = vsub.s32 %v1870, %v1873
      %vm1875 = vcmp.lt.s32.totalorder %v1874, 0
      %v1876 = vsub.s32 0, %v1874
      %v1877 = vsel %vm1875, %v1876, %v1874
      %v1878 = vclz %v1877
      %v1879 = vsub.s32 %v1878, 2
      %vm1880 = vcmp.gt.s32.totalorder 0, %v1879
      %v1881 = vsel %vm1880, 0, %v1879
      %v1882 = vsub.s32 32, %v1881
      %v1883 = vshll.u32 %v1874, %v1881
      %v1884 = vshrl.u32 %v1866, %v1882
      %v1885 = vor.u32 %v1883, %v1884
      %v1886 = vsub.s32 4294967266, %v1881
      %v1887 = vadd.s32 %v1886, 127
      %v1888 = vshll.u32 %v1887, 23
      %v1889 = vor.u32 4788187, %v1888
      %v1890 = vand.u32 2147483647, %v1889
      %v1892 = vcvt.s32.f32 %v1885
      %v1893 = vmul.f32 %v1892, %v1890
      %v1894 = vxor.u32 %v1893, 2147483648
      %v1895 = vsel %vm1812, %v1894, %v1893
      %v1896 = vsub.s32 4, %v1872
      %v1897 = vsel %vm1812, %v1896, %v1872
      %v1898 = vsel %vm1811, %v1806, %v1895
      %v1899 = vsel %vm1811, 0, %v1897
      %v1900 = vcosq.f32.pop %v1898
      %v1901 = vsinq.f32.pop %v1898
      %vm1902 = vweird.f32 %v1806
      %v1903 = vadd.s32 %v1899, 3
      %v1904 = vand.u32 %v1903, 3
      %vm1905 = vcmp.lt.s32.totalorder %v1904, 2
      %vm1906 = vcmp.eq.s32.totalorder %v1904, 0
      %v1907 = vxor.u32 %v1901, 2147483648
      %v1908 = vsel %vm1906, %v1900, %v1907
      %vm1909 = vcmp.eq.s32.totalorder %v1904, 2
      %v1910 = vxor.u32 %v1900, 2147483648
      %v1911 = vsel %vm1909, %v1910, %v1901
      %v1912 = vsel %vm1905, %v1908, %v1911
      %v1913 = vsel %vm1902, nan, %v1912
      %v1914 = vand.u32 2147483647, %v1807
      %vm1915 = vcmp.le.f32.partialorder %v1914, 0.7853982
      %vm1916 = vcmp.lt.s32.totalorder %v1807, 0
      %v1917 = vand.u32 %v1807, 2139095040
      %v1918 = vshrl.u32 %v1917, 23
      %v1919 = vsub.s32 %v1918, 127
      %v1920 = vand.u32 2147483647, %v1807
      %v1921 = vand.u32 %v1920, 8388607
      %v1922 = vor.u32 %v1921, 8388608
      %v1923 = vsub.s32 0, %v1922
      %v1924 = vadd.s32 %v1919, 1
      %vm1925 = vcmp.gt.s32.totalorder %v1924, 0
      %v1926 = vsel %vm1925, %v1924, 0
      %v1927 = vshrl.u32 %v1926, 5
      %v1928 = vand.u32 %v1926, 31
      %v1929 = vsub.s32 32, %v1928
      %v1930 = vshrl.u32 683565275, %v1929
      %v1931 = vshll.u32 683565275, %v1928
      %v1932 = vshrl.u32 2475754826, %v1929
      %v1933 = vor.u32 %v1931, %v1932
      %v1934 = vshll.u32 2475754826, %v1928
      %v1935 = vshrl.u32 2131351028, %v1929
      %v1936 = vor.u32 %v1934, %v1935
      %v1937 = vshll.u32 2131351028, %v1928
      %v1938 = vshrl.u32 2102212464, %v1929
      %v1939 = vor.u32 %v1937, %v1938
      %v1940 = vshll.u32 2102212464, %v1928
      %v1941 = vshrl.u32 920167782, %v1929
      %v1942 = vor.u32 %v1940, %v1941
      %v1943 = vshll.u32 920167782, %v1928
      %v1944 = vshrl.u32 1326507024, %v1929
      %v1945 = vor.u32 %v1943, %v1944
      %vm1946 = vcmp.lt.s32.totalorder %v1927, 1
      %vm1947 = vcmp.lt.s32.totalorder %v1927, 2
      %vm1948 = vcmp.lt.s32.totalorder %v1927, 3
      %vm1949 = vcmp.lt.s32.totalorder %v1927, 4
      %v1950 = vsel %vm1946, %v1930, %v1933
      %v1951 = vsel %vm1949, %v1939, 2102212464
      %v1952 = vsel %vm1948, %v1936, %v1951
      %v1953 = vsel %vm1947, %v1950, %v1952
      %v1954 = vsel %vm1946, %v1933, %v1936
      %v1955 = vsel %vm1949, %v1942, 920167782
      %v1956 = vsel %vm1948, %v1939, %v1955
      %v1957 = vsel %vm1947, %v1954, %v1956
      %v1958 = vsel %vm1946, %v1936, %v1939
      %v1959 = vsel %vm1949, %v1945, 1326507024
      %v1960 = vsel %vm1948, %v1942, %v1959
      %v1961 = vsel %vm1947, %v1958, %v1960
      %v1962 = vshll.u32 %v1922, 8
      %v1963 = vmul.u32.u64.compose %v1962, %v1961
      %v1964 = vextract.low.u32 %v1963
      %v1965 = vextract.high.u32 %v1963
      %v1966 = vmul.u32.u64.compose %v1962, %v1957
      %v1967 = vextract.low.u32 %v1966
      %v1968 = vextract.high.u32 %v1966
      %v1969 = vmul.u32 %v1962, %v1953
      %v1970 = vadd.s32 %v1965, %v1967
      %vm1971 = vc.u32 %v1965, %v1967
      %v1972 = vadd.s32 %v1968, 1
      %v1973 = vsel %vm1971, %v1972, %v1968
      %v1974 = vadd.s32 %v1969, %v1973
      %v1975 = vadd.s32 %v1974, 536870912
      %v1976 = vshrl.u32 %v1975, 30
      %v1977 = vshll.u32 %v1976, 30
      %v1978 = vsub.s32 %v1974, %v1977
      %vm1979 = vcmp.lt.s32.totalorder %v1978, 0
      %v1980 = vsub.s32 0, %v1978
      %v1981 = vsel %vm1979, %v1980, %v1978
      %v1982 = vclz %v1981
      %v1983 = vsub.s32 %v1982, 2
      %vm1984 = vcmp.gt.s32.totalorder 0, %v1983
      %v1985 = vsel %vm1984, 0, %v1983
      %v1986 = vsub.s32 32, %v1985
      %v1987 = vshll.u32 %v1978, %v1985
      %v1988 = vshrl.u32 %v1970, %v1986
      %v1989 = vor.u32 %v1987, %v1988
      %v1990 = vsub.s32 4294967266, %v1985
      %v1991 = vadd.s32 %v1990, 127
      %v1992 = vshll.u32 %v1991, 23
      %v1993 = vor.u32 4788187, %v1992
      %v1994 = vand.u32 2147483647, %v1993
      %v1996 = vcvt.s32.f32 %v1989
      %v1997 = vmul.f32 %v1996, %v1994
      %v1998 = vxor.u32 %v1997, 2147483648
      %v1999 = vsel %vm1916, %v1998, %v1997
      %v2000 = vsub.s32 4, %v1976
      %v2001 = vsel %vm1916, %v2000, %v1976
      %v2002 = vsel %vm1915, %v1807, %v1999
      %v2003 = vsel %vm1915, 0, %v2001
      %v2004 = vcosq.f32.pop %v2002
      %v2005 = vsinq.f32.pop %v2002
      %vm2006 = vweird.f32 %v1807
      %v2007 = vadd.s32 %v2003, 3
      %v2008 = vand.u32 %v2007, 3
      %vm2009 = vcmp.lt.s32.totalorder %v2008, 2
      %vm2010 = vcmp.eq.s32.totalorder %v2008, 0
      %v2011 = vxor.u32 %v2005, 2147483648
      %v2012 = vsel %vm2010, %v2004, %v2011
      %vm2013 = vcmp.eq.s32.totalorder %v2008, 2
      %v2014 = vxor.u32 %v2004, 2147483648
      %v2015 = vsel %vm2013, %v2014, %v2005
      %v2016 = vsel %vm2009, %v2012, %v2015
      %v2017 = vsel %vm2006, nan, %v2016
      %v2018 = vand.u32 2147483647, %v1808
      %vm2019 = vcmp.le.f32.partialorder %v2018, 0.7853982
      %vm2020 = vcmp.lt.s32.totalorder %v1808, 0
      %v2021 = vand.u32 %v1808, 2139095040
      %v2022 = vshrl.u32 %v2021, 23
      %v2023 = vsub.s32 %v2022, 127
      %v2024 = vand.u32 2147483647, %v1808
      %v2025 = vand.u32 %v2024, 8388607
      %v2026 = vor.u32 %v2025, 8388608
      %v2027 = vsub.s32 0, %v2026
      %v2028 = vadd.s32 %v2023, 1
      %vm2029 = vcmp.gt.s32.totalorder %v2028, 0
      %v2030 = vsel %vm2029, %v2028, 0
      %v2031 = vshrl.u32 %v2030, 5
      %v2032 = vand.u32 %v2030, 31
      %v2033 = vsub.s32 32, %v2032
      %v2034 = vshrl.u32 683565275, %v2033
      %v2035 = vshll.u32 683565275, %v2032
      %v2036 = vshrl.u32 2475754826, %v2033
      %v2037 = vor.u32 %v2035, %v2036
      %v2038 = vshll.u32 2475754826, %v2032
      %v2039 = vshrl.u32 2131351028, %v2033
      %v2040 = vor.u32 %v2038, %v2039
      %v2041 = vshll.u32 2131351028, %v2032
      %v2042 = vshrl.u32 2102212464, %v2033
      %v2043 = vor.u32 %v2041, %v2042
      %v2044 = vshll.u32 2102212464, %v2032
      %v2045 = vshrl.u32 920167782, %v2033
      %v2046 = vor.u32 %v2044, %v2045
      %v2047 = vshll.u32 920167782, %v2032
      %v2048 = vshrl.u32 1326507024, %v2033
      %v2049 = vor.u32 %v2047, %v2048
      %vm2050 = vcmp.lt.s32.totalorder %v2031, 1
      %vm2051 = vcmp.lt.s32.totalorder %v2031, 2
      %vm2052 = vcmp.lt.s32.totalorder %v2031, 3
      %vm2053 = vcmp.lt.s32.totalorder %v2031, 4
      %v2054 = vsel %vm2050, %v2034, %v2037
      %v2055 = vsel %vm2053, %v2043, 2102212464
      %v2056 = vsel %vm2052, %v2040, %v2055
      %v2057 = vsel %vm2051, %v2054, %v2056
      %v2058 = vsel %vm2050, %v2037, %v2040
      %v2059 = vsel %vm2053, %v2046, 920167782
      %v2060 = vsel %vm2052, %v2043, %v2059
      %v2061 = vsel %vm2051, %v2058, %v2060
      %v2062 = vsel %vm2050, %v2040, %v2043
      %v2063 = vsel %vm2053, %v2049, 1326507024
      %v2064 = vsel %vm2052, %v2046, %v2063
      %v2065 = vsel %vm2051, %v2062, %v2064
      %v2066 = vshll.u32 %v2026, 8
      %v2067 = vmul.u32.u64.compose %v2066, %v2065
      %v2068 = vextract.low.u32 %v2067
      %v2069 = vextract.high.u32 %v2067
      %v2070 = vmul.u32.u64.compose %v2066, %v2061
      %v2071 = vextract.low.u32 %v2070
      %v2072 = vextract.high.u32 %v2070
      %v2073 = vmul.u32 %v2066, %v2057
      %v2074 = vadd.s32 %v2069, %v2071
      %vm2075 = vc.u32 %v2069, %v2071
      %v2076 = vadd.s32 %v2072, 1
      %v2077 = vsel %vm2075, %v2076, %v2072
      %v2078 = vadd.s32 %v2073, %v2077
      %v2079 = vadd.s32 %v2078, 536870912
      %v2080 = vshrl.u32 %v2079, 30
      %v2081 = vshll.u32 %v2080, 30
      %v2082 = vsub.s32 %v2078, %v2081
      %vm2083 = vcmp.lt.s32.totalorder %v2082, 0
      %v2084 = vsub.s32 0, %v2082
      %v2085 = vsel %vm2083, %v2084, %v2082
      %v2086 = vclz %v2085
      %v2087 = vsub.s32 %v2086, 2
      %vm2088 = vcmp.gt.s32.totalorder 0, %v2087
      %v2089 = vsel %vm2088, 0, %v2087
      %v2090 = vsub.s32 32, %v2089
      %v2091 = vshll.u32 %v2082, %v2089
      %v2092 = vshrl.u32 %v2074, %v2090
      %v2093 = vor.u32 %v2091, %v2092
      %v2094 = vsub.s32 4294967266, %v2089
      %v2095 = vadd.s32 %v2094, 127
      %v2096 = vshll.u32 %v2095, 23
      %v2097 = vor.u32 4788187, %v2096
      %v2098 = vand.u32 2147483647, %v2097
      %v2100 = vcvt.s32.f32 %v2093
      %v2101 = vmul.f32 %v2100, %v2098
      %v2102 = vxor.u32 %v2101, 2147483648
      %v2103 = vsel %vm2020, %v2102, %v2101
      %v2104 = vsub.s32 4, %v2080
      %v2105 = vsel %vm2020, %v2104, %v2080
      %v2106 = vsel %vm2019, %v1808, %v2103
      %v2107 = vsel %vm2019, 0, %v2105
      %v2108 = vcosq.f32.pop %v2106
      %v2109 = vsinq.f32.pop %v2106
      %vm2110 = vweird.f32 %v1808
      %v2111 = vadd.s32 %v2107, 3
      %v2112 = vand.u32 %v2111, 3
      %vm2113 = vcmp.lt.s32.totalorder %v2112, 2
      %vm2114 = vcmp.eq.s32.totalorder %v2112, 0
      %v2115 = vxor.u32 %v2109, 2147483648
      %v2116 = vsel %vm2114, %v2108, %v2115
      %vm2117 = vcmp.eq.s32.totalorder %v2112, 2
      %v2118 = vxor.u32 %v2108, 2147483648
      %v2119 = vsel %vm2117, %v2118, %v2109
      %v2120 = vsel %vm2113, %v2116, %v2119
      %v2121 = vsel %vm2110, nan, %v2120
      %v2122 = vand.u32 2147483647, %v1809
      %vm2123 = vcmp.le.f32.partialorder %v2122, 0.7853982
      %vm2124 = vcmp.lt.s32.totalorder %v1809, 0
      %v2125 = vand.u32 %v1809, 2139095040
      %v2126 = vshrl.u32 %v2125, 23
      %v2127 = vsub.s32 %v2126, 127
      %v2128 = vand.u32 2147483647, %v1809
      %v2129 = vand.u32 %v2128, 8388607
      %v2130 = vor.u32 %v2129, 8388608
      %v2131 = vsub.s32 0, %v2130
      %v2132 = vadd.s32 %v2127, 1
      %vm2133 = vcmp.gt.s32.totalorder %v2132, 0
      %v2134 = vsel %vm2133, %v2132, 0
      %v2135 = vshrl.u32 %v2134, 5
      %v2136 = vand.u32 %v2134, 31
      %v2137 = vsub.s32 32, %v2136
      %v2138 = vshrl.u32 683565275, %v2137
      %v2139 = vshll.u32 683565275, %v2136
      %v2140 = vshrl.u32 2475754826, %v2137
      %v2141 = vor.u32 %v2139, %v2140
      %v2142 = vshll.u32 2475754826, %v2136
      %v2143 = vshrl.u32 2131351028, %v2137
      %v2144 = vor.u32 %v2142, %v2143
      %v2145 = vshll.u32 2131351028, %v2136
      %v2146 = vshrl.u32 2102212464, %v2137
      %v2147 = vor.u32 %v2145, %v2146
      %v2148 = vshll.u32 2102212464, %v2136
      %v2149 = vshrl.u32 920167782, %v2137
      %v2150 = vor.u32 %v2148, %v2149
      %v2151 = vshll.u32 920167782, %v2136
      %v2152 = vshrl.u32 1326507024, %v2137
      %v2153 = vor.u32 %v2151, %v2152
      %vm2154 = vcmp.lt.s32.totalorder %v2135, 1
      %vm2155 = vcmp.lt.s32.totalorder %v2135, 2
      %vm2156 = vcmp.lt.s32.totalorder %v2135, 3
      %vm2157 = vcmp.lt.s32.totalorder %v2135, 4
      %v2158 = vsel %vm2154, %v2138, %v2141
      %v2159 = vsel %vm2157, %v2147, 2102212464
      %v2160 = vsel %vm2156, %v2144, %v2159
      %v2161 = vsel %vm2155, %v2158, %v2160
      %v2162 = vsel %vm2154, %v2141, %v2144
      %v2163 = vsel %vm2157, %v2150, 920167782
      %v2164 = vsel %vm2156, %v2147, %v2163
      %v2165 = vsel %vm2155, %v2162, %v2164
      %v2166 = vsel %vm2154, %v2144, %v2147
      %v2167 = vsel %vm2157, %v2153, 1326507024
      %v2168 = vsel %vm2156, %v2150, %v2167
      %v2169 = vsel %vm2155, %v2166, %v2168
      %v2170 = vshll.u32 %v2130, 8
      %v2171 = vmul.u32.u64.compose %v2170, %v2169
      %v2172 = vextract.low.u32 %v2171
      %v2173 = vextract.high.u32 %v2171
      %v2174 = vmul.u32.u64.compose %v2170, %v2165
      %v2175 = vextract.low.u32 %v2174
      %v2176 = vextract.high.u32 %v2174
      %v2177 = vmul.u32 %v2170, %v2161
      %v2178 = vadd.s32 %v2173, %v2175
      %vm2179 = vc.u32 %v2173, %v2175
      %v2180 = vadd.s32 %v2176, 1
      %v2181 = vsel %vm2179, %v2180, %v2176
      %v2182 = vadd.s32 %v2177, %v2181
      %v2183 = vadd.s32 %v2182, 536870912
      %v2184 = vshrl.u32 %v2183, 30
      %v2185 = vshll.u32 %v2184, 30
      %v2186 = vsub.s32 %v2182, %v2185
      %vm2187 = vcmp.lt.s32.totalorder %v2186, 0
      %v2188 = vsub.s32 0, %v2186
      %v2189 = vsel %vm2187, %v2188, %v2186
      %v2190 = vclz %v2189
      %v2191 = vsub.s32 %v2190, 2
      %vm2192 = vcmp.gt.s32.totalorder 0, %v2191
      %v2193 = vsel %vm2192, 0, %v2191
      %v2194 = vsub.s32 32, %v2193
      %v2195 = vshll.u32 %v2186, %v2193
      %v2196 = vshrl.u32 %v2178, %v2194
      %v2197 = vor.u32 %v2195, %v2196
      %v2198 = vsub.s32 4294967266, %v2193
      %v2199 = vadd.s32 %v2198, 127
      %v2200 = vshll.u32 %v2199, 23
      %v2201 = vor.u32 4788187, %v2200
      %v2202 = vand.u32 2147483647, %v2201
      %v2204 = vcvt.s32.f32 %v2197
      %v2205 = vmul.f32 %v2204, %v2202
      %v2206 = vxor.u32 %v2205, 2147483648
      %v2207 = vsel %vm2124, %v2206, %v2205
      %v2208 = vsub.s32 4, %v2184
      %v2209 = vsel %vm2124, %v2208, %v2184
      %v2210 = vsel %vm2123, %v1809, %v2207
      %v2211 = vsel %vm2123, 0, %v2209
      %v2212 = vcosq.f32.pop %v2210
      %v2213 = vsinq.f32.pop %v2210
      %vm2214 = vweird.f32 %v1809
      %v2215 = vadd.s32 %v2211, 3
      %v2216 = vand.u32 %v2215, 3
      %vm2217 = vcmp.lt.s32.totalorder %v2216, 2
      %vm2218 = vcmp.eq.s32.totalorder %v2216, 0
      %v2219 = vxor.u32 %v2213, 2147483648
      %v2220 = vsel %vm2218, %v2212, %v2219
      %vm2221 = vcmp.eq.s32.totalorder %v2216, 2
      %v2222 = vxor.u32 %v2212, 2147483648
      %v2223 = vsel %vm2221, %v2222, %v2213
      %v2224 = vsel %vm2217, %v2220, %v2223
      %v2225 = vsel %vm2214, nan, %v2224
      %v2226 = vld [vmem:[%s9] sm:$0x7]
      %v2227 = vld [vmem:[%s10] sm:$0x7]
      %2229 = vset.pattern.permute.xlu0 0
      %2230 = vperm.xlu0 %2229, %v2227
      %v2231 = vpop.permute.xlu0 %2230
      %v2234 = vsel %vm1075, %v2226, 0
      %2236 = vmatprep.subr.mxu0 0.0
      %2237 = vmatpush1.msra.mxu0 %v1913
      %2238 = vmatprep.subr.mxu0 0.0
      %2239 = vmatpush1.msra.mxu0 %v2017
      %2240 = vmatprep.subr.mxu0 0.0
      %2241 = vmatpush1.msra.mxu0 %v2121
      %2242 = vmatprep.subr.mxu0 0.0
      %2243 = vmatpush1.msra.mxu0 %v2225
      %2244 = vmatprep.subr.mxu0 0.0
      %2245 = vmatpush1.msra.mxu0 0.0
      %2246 = vmatprep.subr.mxu0 0.0
      %2247 = vmatpush1.msra.mxu0 0.0
      %2248 = vmatprep.subr.mxu0 0.0
      %2249 = vmatpush1.msra.mxu0 0.0
      %2250 = vmatprep.subr.mxu0 0.0
      %2251 = vmatpush1.msra.mxu0 0.0
      %2252 = vmatprep.subr.mxu0 0.0
      %2253 = vmatpush1.msra.mxu0 0.0
      %2254 = vmatprep.subr.mxu0 0.0
      %2255 = vmatpush1.msra.mxu0 0.0
      %2256 = vmatprep.subr.mxu0 0.0
      %2257 = vmatpush1.msra.mxu0 0.0
      %2258 = vmatprep.subr.mxu0 0.0
      %2259 = vmatpush1.msra.mxu0 0.0
      %2260 = vmatprep.subr.mxu0 0.0
      %2261 = vmatpush1.msra.mxu0 0.0
      %2262 = vmatprep.subr.mxu0 0.0
      %2263 = vmatpush1.msra.mxu0 0.0
      %2264 = vmatprep.subr.mxu0 0.0
      %2265 = vmatpush1.msra.mxu0 0.0
      %2266 = vmatprep.subr.mxu0 0.0
      %2267 = vmatpush1.msra.mxu0 0.0
      %2268 = vmatprep.subr.mxu0 0.0
      %2269 = vmatpush1.msra.mxu0 0.0
      %2270 = vmatprep.subr.mxu0 0.0
      %2271 = vmatpush1.msra.mxu0 0.0
      %2272 = vmatprep.subr.mxu0 0.0
      %2273 = vmatpush1.msra.mxu0 0.0
      %2274 = vmatprep.subr.mxu0 0.0
      %2275 = vmatpush1.msra.mxu0 0.0
      %2276 = vmatprep.subr.mxu0 0.0
      %2277 = vmatpush1.msra.mxu0 0.0
      %2278 = vmatprep.subr.mxu0 0.0
      %2279 = vmatpush1.msra.mxu0 0.0
      %2280 = vmatprep.subr.mxu0 0.0
      %2281 = vmatpush1.msra.mxu0 0.0
      %2282 = vmatprep.subr.mxu0 0.0
      %2283 = vmatpush1.msra.mxu0 0.0
      %2284 = vmatprep.subr.mxu0 0.0
      %2285 = vmatpush1.msra.mxu0 0.0
      %2286 = vmatprep.subr.mxu0 0.0
      %2287 = vmatpush1.msra.mxu0 0.0
      %2288 = vmatprep.subr.mxu0 0.0
      %2289 = vmatpush1.msra.mxu0 0.0
      %2290 = vmatprep.subr.mxu0 0.0
      %2291 = vmatpush1.msra.mxu0 0.0
      %2292 = vmatprep.subr.mxu0 0.0
      %2293 = vmatpush1.msra.mxu0 0.0
      %2294 = vmatprep.subr.mxu0 0.0
      %2295 = vmatpush1.msra.mxu0 0.0
      %2296 = vmatprep.subr.mxu0 0.0
      %2297 = vmatpush1.msra.mxu0 0.0
      %2298 = vmatprep.subr.mxu0 0.0
      %2299 = vmatpush1.msra.mxu0 0.0
      %2300 = vmatprep.mubr.f32.mxu0 0.0
      %2301 = vmatmul.mubr.f32.gmra.mrb[0].mxu0 %v2234
      %v2302 = vpop.f32.mrb[0].mxu0
      %v2303 = vadd.f32 %v2231, %v2302
      %v2304 = vpop.f32.mrb[0].mxu0
      %2305 = vdwg.mxu0
      %v2306 = vmul.f32 %v2303, 1.442695
      %v2307 = vpow.pop %v2306
      %2308 = vst [vmem:[%s441] sm:$0x7] %v2307
      %p2309 = scmp.lt.s32.totalorder %s22, 1
      %s2310 = scalar_select %p2309, %s22, 1
      %s2311 = smul.addr %s2310, 4
      %s2312 = scalar_lea.vmem %s11, %s2311
      // Predicated region
      $region65: #{tpu_custom_call.1} parent=63 // pred_check
        %p2313 = pneg %p291
      $region66: #{tpu_custom_call.1} parent=63 // pred_check_branch
        %2315 = sbr.rel (%p2313) target = $region68
      $region67: #{tpu_custom_call.1} parent=63 // pred_region
        _
      $region68: #{tpu_custom_call.1} parent=63 // pred_fallthru
        _
    $region64: #{tpu_custom_call.1} parent=5 // pred_fallthru
      _
    %p2316 = scmp.le.s32.totalorder 2, %s17
    // Predicated region
    $region69: #{tpu_custom_call.1} parent=5 // pred_check
      %p2317 = pneg %p2316
    $region70: #{tpu_custom_call.1} parent=5 // pred_check_branch
      %2319 = sbr.rel (%p2317) target = $region72
    $region71: #{tpu_custom_call.1} parent=5 // pred_region
      %s2320 = ssub.s32 %s17, 2
      // Predicated region
      $region73: #{tpu_custom_call.1} parent=71 // pred_check
        %p2321 = pneg %p297
      $region74: #{tpu_custom_call.1} parent=71 // pred_check_branch
        %2323 = sbr.rel (%p2321) target = $region76
      $region75: #{tpu_custom_call.1} parent=71 // pred_region
        %p2324 = scmp.lt.s32.totalorder %s23, 1
        %s2325 = scalar_select %p2324, %s23, 1
        %s2326 = smul.addr %s2325, 4
        %s2327 = scalar_lea.vmem %s11, %s2326
      $region76: #{tpu_custom_call.1} parent=71 // pred_fallthru
        _
    $region72: #{tpu_custom_call.1} parent=5 // pred_fallthru
      _
  $region6: #{tpu_custom_call.1} parent=0 // loop_footer
    %s21 = sadd.s32 1, %s17
  $region7: #{tpu_custom_call.1} parent=0 // loop_footer_branch
    %16 = sbr.rel target = $region3
  $region8: #{tpu_custom_call.1} parent=0 // loop_exit
    _

</llo_original>
